<compile_context>
chip_gen: v6e
topology: v6e:2x2x1
jax: 0.10.0
libtpu: 0.0.40
codegen_flags: <defaults>
</compile_context>

<pallas_src>
import functools

import jax
import jax.numpy as jnp
from jax.experimental import pallas as pl
from jax.experimental.pallas import tpu as pltpu


def _attention_kernel(xq_ref, xkv_ref, wq_ref, wk_ref, wv_ref,
                      wout_ref, bout_ref, o_ref,
                      *, heads, dim_head, scale):
    """One (batch, q-tile) grid step.

    xq_ref   : (1, TQ, Dp)   rows whose queries this step computes
    xkv_ref  : (1, N,  Dp)   full sequence (source of K / V)
    wq/wk/wv : (Dp, inner)
    wout_ref : (inner, Dp)
    bout_ref : (1, Dp)
    o_ref    : (1, TQ, Dp)
    """
    inner = heads * dim_head

    xq = xq_ref[0].astype(jnp.bfloat16)          # (TQ, Dp)
    xkv = xkv_ref[0].astype(jnp.bfloat16)        # (N,  Dp)
    wq = wq_ref[...].astype(jnp.bfloat16)        # (Dp, inner)
    wk = wk_ref[...].astype(jnp.bfloat16)
    wv = wv_ref[...].astype(jnp.bfloat16)

    tq = xq.shape[0]
    n = xkv.shape[0]

    # --- projections: bf16 MXU operands, f32 accumulation ----------------
    q = jnp.dot(xq, wq, preferred_element_type=jnp.float32)    # (TQ, inner)
    k = jnp.dot(xkv, wk, preferred_element_type=jnp.float32)   # (N,  inner)
    v = jnp.dot(xkv, wv, preferred_element_type=jnp.float32)   # (N,  inner)

    q = q * scale   # pre-scale q (smaller tensor than the score matrix)

    # --- single relayout per tensor: (rows, h*d) -> (h, rows, d) ---------
    qh = q.reshape(tq, heads, dim_head).transpose(1, 0, 2).astype(jnp.bfloat16)
    kh = k.reshape(n, heads, dim_head).transpose(1, 0, 2).astype(jnp.bfloat16)
    vh = v.reshape(n, heads, dim_head).transpose(1, 0, 2).astype(jnp.bfloat16)

    # --- batched scores: contract dim_head, batch over heads (no .T) -----
    dots = jnp.einsum('hqd,hkd->hqk', qh, kh,
                      preferred_element_type=jnp.float32)      # (h, TQ, N) f32

    # numerically-stable softmax in f32; EUP approx reciprocal for 1/sum
    dots = dots - jnp.max(dots, axis=-1, keepdims=True)
    e = jnp.exp(dots)
    attn = e * pl.reciprocal(jnp.sum(e, axis=-1, keepdims=True), approx=True)

    # --- batched attn @ V -------------------------------------------------
    out_h = jnp.einsum('hqk,hkd->hqd', attn.astype(jnp.bfloat16), vh,
                       preferred_element_type=jnp.float32)     # (h, TQ, d)

    # (h, TQ, d) -> (TQ, h*d)
    out = out_h.transpose(1, 0, 2).reshape(tq, inner).astype(jnp.bfloat16)

    # --- output projection + bias (Dropout(0.0) == identity) -------------
    y = jnp.dot(out, wout_ref[...].astype(jnp.bfloat16),
                preferred_element_type=jnp.float32) + bout_ref[0]

    o_ref[0] = y.astype(o_ref.dtype)


def attention_forward(x, w_q, w_k, w_v, w_out, b_out, *, heads, dim_head):
    """x: (B, N, D) f32.  w_q/w_k/w_v: (D, inner).  w_out: (inner, D).  b_out: (D,)."""
    B, N, D = x.shape
    inner = heads * dim_head
    scale = dim_head ** (-0.5)

    # Pad the feature (lane) dim to a multiple of 128 so kernel loads/stores
    # are lane-dense (unmasked).  Zero pad rows/cols do not change the math.
    Dp = max(128, ((D + 127) // 128) * 128)
    pad = Dp - D
    if pad:
        x = jnp.pad(x, ((0, 0), (0, 0), (0, pad)))
        w_q = jnp.pad(w_q, ((0, pad), (0, 0)))
        w_k = jnp.pad(w_k, ((0, pad), (0, 0)))
        w_v = jnp.pad(w_v, ((0, pad), (0, 0)))
        w_out = jnp.pad(w_out, ((0, 0), (0, pad)))
        b_out = jnp.pad(b_out, (0, pad))
    b_out2d = b_out.reshape(1, Dp).astype(jnp.float32)

    # q-tile the sequence axis: 128 when it divides N, else whole sequence.
    # TODO(synk): flash-style KV tiling (online softmax) for very long N.
    TQ = 128 if (N % 128 == 0) else N
    nq = N // TQ

    kernel = functools.partial(_attention_kernel,
                               heads=heads, dim_head=dim_head, scale=scale)

    y = pl.pallas_call(
        kernel,
        out_shape=jax.ShapeDtypeStruct((B, N, Dp), jnp.float32),
        grid_spec=pltpu.PrefetchScalarGridSpec(
            num_scalar_prefetch=0,
            grid=(B, nq),
            in_specs=[
                pl.BlockSpec((1, TQ, Dp), lambda b, q: (b, q, 0)),   # x (q rows)
                pl.BlockSpec((1, N, Dp), lambda b, q: (b, 0, 0)),    # x (kv rows)
                pl.BlockSpec((Dp, inner), lambda b, q: (0, 0)),      # W_q
                pl.BlockSpec((Dp, inner), lambda b, q: (0, 0)),      # W_k
                pl.BlockSpec((Dp, inner), lambda b, q: (0, 0)),      # W_v
                pl.BlockSpec((inner, Dp), lambda b, q: (0, 0)),      # W_out
                pl.BlockSpec((1, Dp), lambda b, q: (0, 0)),          # b_out
            ],
            out_specs=pl.BlockSpec((1, TQ, Dp), lambda b, q: (b, q, 0)),
        ),
        compiler_params=pltpu.CompilerParams(
            dimension_semantics=("parallel", "parallel"),
            vmem_limit_bytes=48 * 1024 * 1024,
        ),
    )(x, x, w_q, w_k, w_v, w_out, b_out2d)

    return y[..., :D] if pad else y


def attention_reference(x, w_q, w_k, w_v, w_out, b_out, *, heads, dim_head):
    """Plain-JAX f32 reference mirroring the PyTorch module."""
    B, N, D = x.shape
    inner = heads * dim_head
    scale = dim_head ** (-0.5)
    q, k, v = x @ w_q, x @ w_k, x @ w_v                       # (B, N, inner)

    def split_heads(t):  # 'b n (h d) -> b h n d'
        return t.reshape(B, N, heads, dim_head).transpose(0, 2, 1, 3)

    q, k, v = map(split_heads, (q, k, v))
    dots = jnp.einsum("bhnd,bhmd->bhnm", q, k) * scale
    attn = jax.nn.softmax(dots, axis=-1)
    out = jnp.einsum("bhnm,bhmd->bhnd", attn, v)
    out = out.transpose(0, 2, 1, 3).reshape(B, N, inner)      # 'b h n d -> b n (h d)'
    return out @ w_out + b_out                                # Dropout(0.0) == id


if __name__ == "__main__":
    # Small, module-consistent shapes.
    B, N, DIM = 2, 8, 32
    HEADS, DIM_HEAD = 4, 16
    INNER = HEADS * DIM_HEAD

    key = jax.random.PRNGKey(0)
    kx, kq, kk, kv, ko, kb = jax.random.split(key, 6)

    x = jax.random.normal(kx, (B, N, DIM), dtype=jnp.float32)
    # Parameters stored pre-transposed / pre-split relative to PyTorch:
    #   to_qkv.weight (3*inner, D)  ->  W_q, W_k, W_v each (D, inner)
    #   to_out[0].weight (D, inner) ->  W_out (inner, D);  bias -> b_out (D,)
    w_q = jax.random.normal(kq, (DIM, INNER), dtype=jnp.float32) * (DIM ** -0.5)
    w_k = jax.random.normal(kk, (DIM, INNER), dtype=jnp.float32) * (DIM ** -0.5)
    w_v = jax.random.normal(kv, (DIM, INNER), dtype=jnp.float32) * (DIM ** -0.5)
    w_out = jax.random.normal(ko, (INNER, DIM), dtype=jnp.float32) * (INNER ** -0.5)
    b_out = jax.random.normal(kb, (DIM,), dtype=jnp.float32) * 0.02

    y = attention_forward(x, w_q, w_k, w_v, w_out, b_out,
                          heads=HEADS, dim_head=DIM_HEAD)
    y = jax.block_until_ready(y)

    y_ref = attention_reference(x, w_q, w_k, w_v, w_out, b_out,
                                heads=HEADS, dim_head=DIM_HEAD)
    assert y.shape == (B, N, DIM)
    # bf16 MXU operands + approx reciprocal -> slightly looser tolerance vs f32 ref.
    assert jnp.allclose(y, y_ref, rtol=5e-2, atol=5e-2), "Pallas output mismatch"

    print("KERNEL_OK")
</pallas_src>

<mosaic_0001>
module attributes {stable_mosaic.version = 11 : i64} {
  func.func @_attention_kernel(%arg0: i32, %arg1: i32, %arg2: memref<1x8x128xf32, #tpu.memory_space<vmem>>, %arg3: memref<1x8x128xf32, #tpu.memory_space<vmem>>, %arg4: memref<128x64xf32, #tpu.memory_space<vmem>>, %arg5: memref<128x64xf32, #tpu.memory_space<vmem>>, %arg6: memref<128x64xf32, #tpu.memory_space<vmem>>, %arg7: memref<64x128xf32, #tpu.memory_space<vmem>>, %arg8: memref<1x128xf32, #tpu.memory_space<vmem>>, %arg9: memref<1x8x128xf32, #tpu.memory_space<vmem>>) attributes {dimension_semantics = [#tpu.dimension_semantics<parallel>, #tpu.dimension_semantics<parallel>], iteration_bounds = array<i64: 2, 1>, scalar_prefetch = 0 : i64, scratch_operands = 0 : i64, tpu.core_type = #tpu.core_type<tc>, window_params = [{transform_indices = @transform_0, window_bounds = array<i64: 1, 8, 128>}, {transform_indices = @transform_1, window_bounds = array<i64: 1, 8, 128>}, {pipeline_mode = #tpu.pipeline_mode<synchronous>, transform_indices = @transform_2, window_bounds = array<i64: 128, 64>}, {pipeline_mode = #tpu.pipeline_mode<synchronous>, transform_indices = @transform_3, window_bounds = array<i64: 128, 64>}, {pipeline_mode = #tpu.pipeline_mode<synchronous>, transform_indices = @transform_4, window_bounds = array<i64: 128, 64>}, {pipeline_mode = #tpu.pipeline_mode<synchronous>, transform_indices = @transform_5, window_bounds = array<i64: 64, 128>}, {pipeline_mode = #tpu.pipeline_mode<synchronous>, transform_indices = @transform_6, window_bounds = array<i64: 1, 128>}, {transform_indices = @transform_7, window_bounds = array<i64: 1, 8, 128>}]} {
    %c0 = arith.constant 0 : index
    %c0_0 = arith.constant 0 : index
    %c0_1 = arith.constant 0 : index
    %0 = vector.load %arg2[%c0, %c0_0, %c0_1] : memref<1x8x128xf32, #tpu.memory_space<vmem>>, vector<1x8x128xf32>
    %1 = vector.shape_cast %0 : vector<1x8x128xf32> to vector<8x128xf32>
    %2 = arith.truncf %1 : vector<8x128xf32> to vector<8x128xbf16>
    %c0_2 = arith.constant 0 : index
    %c0_3 = arith.constant 0 : index
    %c0_4 = arith.constant 0 : index
    %3 = vector.load %arg3[%c0_2, %c0_3, %c0_4] : memref<1x8x128xf32, #tpu.memory_space<vmem>>, vector<1x8x128xf32>
    %4 = vector.shape_cast %3 : vector<1x8x128xf32> to vector<8x128xf32>
    %5 = arith.truncf %4 : vector<8x128xf32> to vector<8x128xbf16>
    %c0_5 = arith.constant 0 : index
    %c0_6 = arith.constant 0 : index
    %6 = vector.load %arg4[%c0_5, %c0_6] : memref<128x64xf32, #tpu.memory_space<vmem>>, vector<128x64xf32>
    %7 = arith.truncf %6 : vector<128x64xf32> to vector<128x64xbf16>
    %c0_7 = arith.constant 0 : index
    %c0_8 = arith.constant 0 : index
    %8 = vector.load %arg5[%c0_7, %c0_8] : memref<128x64xf32, #tpu.memory_space<vmem>>, vector<128x64xf32>
    %9 = arith.truncf %8 : vector<128x64xf32> to vector<128x64xbf16>
    %c0_9 = arith.constant 0 : index
    %c0_10 = arith.constant 0 : index
    %10 = vector.load %arg6[%c0_9, %c0_10] : memref<128x64xf32, #tpu.memory_space<vmem>>, vector<128x64xf32>
    %11 = arith.truncf %10 : vector<128x64xf32> to vector<128x64xbf16>
    %cst = arith.constant dense<0.000000e+00> : vector<8x64xf32>
    %12 = tpu.matmul %2, %7, %cst {dimension_numbers = #tpu.dot_dimension_numbers<[1], [0], [0], [1], [0, 0, 1, 1], [], []>} : vector<8x128xbf16>, vector<128x64xbf16>, vector<8x64xf32> -> vector<8x64xf32>
    %cst_11 = arith.constant dense<0.000000e+00> : vector<8x64xf32>
    %13 = tpu.matmul %5, %9, %cst_11 {dimension_numbers = #tpu.dot_dimension_numbers<[1], [0], [0], [1], [0, 0, 1, 1], [], []>} : vector<8x128xbf16>, vector<128x64xbf16>, vector<8x64xf32> -> vector<8x64xf32>
    %cst_12 = arith.constant dense<0.000000e+00> : vector<8x64xf32>
    %14 = tpu.matmul %5, %11, %cst_12 {dimension_numbers = #tpu.dot_dimension_numbers<[1], [0], [0], [1], [0, 0, 1, 1], [], []>} : vector<8x128xbf16>, vector<128x64xbf16>, vector<8x64xf32> -> vector<8x64xf32>
    %cst_13 = arith.constant 2.500000e-01 : f32
    %15 = vector.broadcast %cst_13 : f32 to vector<8x64xf32>
    %16 = arith.mulf %12, %15 : vector<8x64xf32>
    %17 = vector.shape_cast %16 : vector<8x64xf32> to vector<8x4x16xf32>
    %18 = tpu.transpose %17, [1, 0, 2] : vector<8x4x16xf32> -> vector<4x8x16xf32>
    %19 = arith.truncf %18 : vector<4x8x16xf32> to vector<4x8x16xbf16>
    %20 = vector.shape_cast %13 : vector<8x64xf32> to vector<8x4x16xf32>
    %21 = tpu.transpose %20, [1, 0, 2] : vector<8x4x16xf32> -> vector<4x8x16xf32>
    %22 = arith.truncf %21 : vector<4x8x16xf32> to vector<4x8x16xbf16>
    %23 = vector.shape_cast %14 : vector<8x64xf32> to vector<8x4x16xf32>
    %24 = tpu.transpose %23, [1, 0, 2] : vector<8x4x16xf32> -> vector<4x8x16xf32>
    %25 = arith.truncf %24 : vector<4x8x16xf32> to vector<4x8x16xbf16>
    "tpu.trace_start"() <{level = 10 : i32, message = "hqd,hkd->hqk"}> : () -> ()
    %cst_14 = arith.constant dense<0.000000e+00> : vector<4x8x8xf32>
    %26 = tpu.matmul %19, %22, %cst_14 {dimension_numbers = #tpu.dot_dimension_numbers<[2], [2], [1], [1], [0, 0, 0, 1, 1, 1], [0], [0]>} : vector<4x8x16xbf16>, vector<4x8x16xbf16>, vector<4x8x8xf32> -> vector<4x8x8xf32>
    "tpu.trace_stop"() : () -> ()
    %cst_15 = arith.constant dense<0xFF800000> : vector<4x8xf32>
    %27 = vector.multi_reduction <maximumf>, %26, %cst_15 [2] : vector<4x8x8xf32> to vector<4x8xf32>
    %28 = vector.shape_cast %27 : vector<4x8xf32> to vector<4x8x1xf32>
    %29 = vector.broadcast %28 : vector<4x8x1xf32> to vector<4x8x8xf32>
    %30 = arith.subf %26, %29 : vector<4x8x8xf32>
    %31 = math.exp %30 : vector<4x8x8xf32>
    %cst_16 = arith.constant dense<0.000000e+00> : vector<4x8xf32>
    %32 = vector.multi_reduction <add>, %31, %cst_16 [2] : vector<4x8x8xf32> to vector<4x8xf32>
    %33 = vector.shape_cast %32 : vector<4x8xf32> to vector<4x8x1xf32>
    %34 = tpu.reciprocal %33 {approx = true} : vector<4x8x1xf32> -> vector<4x8x1xf32>
    %35 = vector.broadcast %34 : vector<4x8x1xf32> to vector<4x8x8xf32>
    %36 = arith.mulf %31, %35 : vector<4x8x8xf32>
    %37 = arith.truncf %36 : vector<4x8x8xf32> to vector<4x8x8xbf16>
    "tpu.trace_start"() <{level = 10 : i32, message = "hqk,hkd->hqd"}> : () -> ()
    %cst_17 = arith.constant dense<0.000000e+00> : vector<4x8x16xf32>
    %38 = tpu.matmul %37, %25, %cst_17 {dimension_numbers = #tpu.dot_dimension_numbers<[2], [1], [1], [2], [0, 0, 0, 1, 1, 2], [0], [0]>} : vector<4x8x8xbf16>, vector<4x8x16xbf16>, vector<4x8x16xf32> -> vector<4x8x16xf32>
    "tpu.trace_stop"() : () -> ()
    %39 = tpu.transpose %38, [1, 0, 2] : vector<4x8x16xf32> -> vector<8x4x16xf32>
    %40 = vector.shape_cast %39 : vector<8x4x16xf32> to vector<8x64xf32>
    %41 = arith.truncf %40 : vector<8x64xf32> to vector<8x64xbf16>
    %c0_18 = arith.constant 0 : index
    %c0_19 = arith.constant 0 : index
    %42 = vector.load %arg7[%c0_18, %c0_19] : memref<64x128xf32, #tpu.memory_space<vmem>>, vector<64x128xf32>
    %43 = arith.truncf %42 : vector<64x128xf32> to vector<64x128xbf16>
    %cst_20 = arith.constant dense<0.000000e+00> : vector<8x128xf32>
    %44 = tpu.matmul %41, %43, %cst_20 {dimension_numbers = #tpu.dot_dimension_numbers<[1], [0], [0], [1], [0, 0, 1, 1], [], []>} : vector<8x64xbf16>, vector<64x128xbf16>, vector<8x128xf32> -> vector<8x128xf32>
    %c0_21 = arith.constant 0 : index
    %c0_22 = arith.constant 0 : index
    %45 = vector.load %arg8[%c0_21, %c0_22] : memref<1x128xf32, #tpu.memory_space<vmem>>, vector<1x128xf32>
    %46 = vector.shape_cast %45 : vector<1x128xf32> to vector<128xf32>
    %47 = vector.shape_cast %46 : vector<128xf32> to vector<1x128xf32>
    %48 = vector.broadcast %47 : vector<1x128xf32> to vector<8x128xf32>
    %49 = arith.addf %44, %48 : vector<8x128xf32>
    %c0_23 = arith.constant 0 : index
    %c0_24 = arith.constant 0 : index
    %c0_25 = arith.constant 0 : index
    %50 = vector.load %arg9[%c0_23, %c0_24, %c0_25] : memref<1x8x128xf32, #tpu.memory_space<vmem>>, vector<1x8x128xf32>
    %51 = vector.shape_cast %50 : vector<1x8x128xf32> to vector<8x128xf32>
    %52 = vector.shape_cast %49 : vector<8x128xf32> to vector<1x8x128xf32>
    tpu.vector_store %arg9[%c0_23, %c0_24, %c0_25], %52 {strides = array<i32>} : memref<1x8x128xf32, #tpu.memory_space<vmem>>, vector<1x8x128xf32>,
    return
  }
  func.func @transform_0(%arg0: i32, %arg1: i32) -> (i32, i32, i32) {
    %c0_i32 = arith.constant 0 : i32
    %c0_i32_0 = arith.constant 0 : i32
    return %arg0, %arg1, %c0_i32 : i32, i32, i32
  }
  func.func @transform_1(%arg0: i32, %arg1: i32) -> (i32, i32, i32) {
    %c0_i32 = arith.constant 0 : i32
    %c0_i32_0 = arith.constant 0 : i32
    %c0_i32_1 = arith.constant 0 : i32
    return %arg0, %c0_i32, %c0_i32_0 : i32, i32, i32
  }
  func.func @transform_2(%arg0: i32, %arg1: i32) -> (i32, i32) {
    %c0_i32 = arith.constant 0 : i32
    %c0_i32_0 = arith.constant 0 : i32
    %c0_i32_1 = arith.constant 0 : i32
    return %c0_i32, %c0_i32_0 : i32, i32
  }
  func.func @transform_3(%arg0: i32, %arg1: i32) -> (i32, i32) {
    %c0_i32 = arith.constant 0 : i32
    %c0_i32_0 = arith.constant 0 : i32
    %c0_i32_1 = arith.constant 0 : i32
    return %c0_i32, %c0_i32_0 : i32, i32
  }
  func.func @transform_4(%arg0: i32, %arg1: i32) -> (i32, i32) {
    %c0_i32 = arith.constant 0 : i32
    %c0_i32_0 = arith.constant 0 : i32
    %c0_i32_1 = arith.constant 0 : i32
    return %c0_i32, %c0_i32_0 : i32, i32
  }
  func.func @transform_5(%arg0: i32, %arg1: i32) -> (i32, i32) {
    %c0_i32 = arith.constant 0 : i32
    %c0_i32_0 = arith.constant 0 : i32
    %c0_i32_1 = arith.constant 0 : i32
    return %c0_i32, %c0_i32_0 : i32, i32
  }
  func.func @transform_6(%arg0: i32, %arg1: i32) -> (i32, i32) {
    %c0_i32 = arith.constant 0 : i32
    %c0_i32_0 = arith.constant 0 : i32
    %c0_i32_1 = arith.constant 0 : i32
    return %c0_i32, %c0_i32_0 : i32, i32
  }
  func.func @transform_7(%arg0: i32, %arg1: i32) -> (i32, i32, i32) {
    %c0_i32 = arith.constant 0 : i32
    %c0_i32_0 = arith.constant 0 : i32
    return %arg0, %arg1, %c0_i32 : i32, i32, i32
  }
}

</mosaic_0001>

<llo_original>
// kernel: tpu_custom_call.1
$region0: #{tpu_custom_call.1}
  #allocation0 [shape = 'u32[]', space=smem, size = 0x4, offset = 0x4, fixed_abs, tag = 'smem constant byte address 0x4 - core index']
  #allocation1 [shape = 'u32[144,128]{1,0:T(1,128)}', space=vmem, size = 0x12000, scoped, tag = 'internal scratch']
  %s0 = inlined_call_operand.vmem [shape: f32[2,8,128], index: 0, kind: input, shape index: {}]
  %s1 = inlined_call_operand.vmem [shape: f32[2,8,128], index: 1, kind: input, shape index: {}]
  %s2 = inlined_call_operand.vmem [shape: f32[128,64], index: 2, kind: input, shape index: {}]
  %s3 = inlined_call_operand.vmem [shape: f32[128,64], index: 3, kind: input, shape index: {}]
  %s4 = inlined_call_operand.vmem [shape: f32[128,64], index: 4, kind: input, shape index: {}]
  %s5 = inlined_call_operand.vmem [shape: f32[64,128], index: 5, kind: input, shape index: {}]
  %s6 = inlined_call_operand.vmem [shape: f32[1,128], index: 6, kind: input, shape index: {}]
  %s7 = inlined_call_operand.hbm [shape: f32[2,8,128], index: 7, kind: output, shape index: {}]
  %s8 = sld [smem:[#allocation0]]
  $region61: #{tpu_custom_call.1} parent=0
    _
  %s10 = ssub.s32 1, %s8
  %s11 = scalar_select 0, %s10, %s8
  $region1: #{tpu_custom_call.1} parent=0
    #allocation2 [shape = 'u8[8192]{0}', space=vmem, size = 0x2000, scoped, tag = 'output window, operand 0']
    #allocation3 [shape = 's32[2]{0}', space=sflag, size = 0x8, scoped, tag = 'scoped memory for tpu_custom_call.1']
    %12 = vsyncpa [#allocation3], 0
    %s13 = scalar_lea.sflag [#allocation3], 1
    %14 = vsyncpa %s13, 0
    loop: start=0, step=1, limit=4
    $region2: #{tpu_custom_call.1} parent=1 // loop_pre_header
      _
    $region3: #{tpu_custom_call.1} parent=1 // loop_header
      %s16 = sphi 0, %s20
      %p17 = scmp.ge.s32.totalorder %s16, 4
      %s23 = sphi 0, %s35
      %s24 = sphi 0, %s31
      %s25 = sphi 0, %s23
      %s26 = sphi 0, %s24
      %s27 = sphi 0, %s25
      %s28 = sphi 0, %s26
      %s40 = sphi 0, %s42
      %s43 = sphi 0, %s40
      %s44 = sphi 0, %s43
      %s60 = sphi 0, %s44
      %s66 = sphi 0, %s68
      %s69 = sphi 0, %s66
      %s70 = sphi 0, %s69
      %s86 = sphi 0, %s70
      %s90 = sphi 0, %s90
      %s92 = sphi 0, %s90
      %s93 = sphi 0, %s92
      %s107 = sphi 0, %s93
      %s111 = sphi 0, %s111
      %s113 = sphi 0, %s111
      %s114 = sphi 0, %s113
      %s128 = sphi 0, %s114
      %s132 = sphi 0, %s132
      %s134 = sphi 0, %s132
      %s135 = sphi 0, %s134
      %s149 = sphi 0, %s135
      %s153 = sphi 0, %s153
      %s155 = sphi 0, %s153
      %s156 = sphi 0, %s155
      %s170 = sphi 0, %s156
      %s174 = sphi 0, %s174
      %s176 = sphi 0, %s174
      %s177 = sphi 0, %s176
      %s191 = sphi 0, %s177
      %s199 = sphi 0, %s201
      %s202 = sphi 0, %s199
      %s203 = sphi 0, %s202
      %s219 = sphi 0, %s203
    $region4: #{tpu_custom_call.1} parent=1 // loop_header_branch
      %19 = sbr.rel (%p17) target = $region8
    $region5: #{tpu_custom_call.1} parent=1 // loop_body
      %s21 = ssub.s32 %s16, 1
      %s22 = ssub.s32 %s16, 2
      %s29 = sadd.s32 1, %s24
      %p30 = scmp.ge.s32.totalorder %s29, 1
      %s31 = scalar_select %p30, 0, %s29
      %s32 = sadd.s32 1, %s23
      %s33 = scalar_select %p30, %s32, %s23
      %p34 = scmp.ge.s32.totalorder %s33, 2
      %s35 = scalar_select %p34, 0, %s33
      %s36 = ssub.s32 %s23, %s35
      %s37 = ssub.s32 %s24, %s31
      %s38 = sor.u32 %s36, %s37
      %p39 = scmp.eq.s32.totalorder %s38, 0
      %s41 = sadd.s32 %s40, 1
      %s42 = scalar_select %p39, %s40, %s41
      %p45 = pneg %p39
      %p46 = scmp.eq.s32.totalorder %s16, 1
      %p47 = por %p45, %p46
      %p48 = scmp.ne.s32.totalorder %s40, %s43
      %p49 = scmp.eq.s32.totalorder %s16, 0
      %p50 = por %p48, %p49
      %p51 = scmp.ne.s32.totalorder %s40, %s43
      %p52 = scmp.eq.s32.totalorder %s21, 1
      %p53 = por %p51, %p52
      %p54 = scmp.ne.s32.totalorder %s43, %s44
      %p55 = scmp.eq.s32.totalorder %s21, 0
      %p56 = por %p54, %p55
      %p57 = scmp.ne.s32.totalorder %s43, %s44
      %p58 = scmp.eq.s32.totalorder %s22, 1
      %p59 = por %p57, %p58
      %p61 = scmp.ne.s32.totalorder %s44, %s60
      %p62 = scmp.eq.s32.totalorder %s22, 0
      %p63 = por %p61, %p62
      %s64 = ssub.s32 %s23, %s35
      %p65 = scmp.eq.s32.totalorder %s64, 0
      %s67 = sadd.s32 %s66, 1
      %s68 = scalar_select %p65, %s66, %s67
      %p71 = pneg %p65
      %p72 = scmp.eq.s32.totalorder %s16, 1
      %p73 = por %p71, %p72
      %p74 = scmp.ne.s32.totalorder %s66, %s69
      %p75 = scmp.eq.s32.totalorder %s16, 0
      %p76 = por %p74, %p75
      %p77 = scmp.ne.s32.totalorder %s66, %s69
      %p78 = scmp.eq.s32.totalorder %s21, 1
      %p79 = por %p77, %p78
      %p80 = scmp.ne.s32.totalorder %s69, %s70
      %p81 = scmp.eq.s32.totalorder %s21, 0
      %p82 = por %p80, %p81
      %p83 = scmp.ne.s32.totalorder %s69, %s70
      %p84 = scmp.eq.s32.totalorder %s22, 1
      %p85 = por %p83, %p84
      %p87 = scmp.ne.s32.totalorder %s70, %s86
      %p88 = scmp.eq.s32.totalorder %s22, 0
      %p89 = por %p87, %p88
      %s91 = sadd.s32 %s90, 1
      %p94 = scmp.eq.s32.totalorder %s16, 1
      %p95 = scmp.ne.s32.totalorder %s90, %s92
      %p96 = scmp.eq.s32.totalorder %s16, 0
      %p97 = por %p95, %p96
      %p98 = scmp.ne.s32.totalorder %s90, %s92
      %p99 = scmp.eq.s32.totalorder %s21, 1
      %p100 = por %p98, %p99
      %p101 = scmp.ne.s32.totalorder %s92, %s93
      %p102 = scmp.eq.s32.totalorder %s21, 0
      %p103 = por %p101, %p102
      %p104 = scmp.ne.s32.totalorder %s92, %s93
      %p105 = scmp.eq.s32.totalorder %s22, 1
      %p106 = por %p104, %p105
      %p108 = scmp.ne.s32.totalorder %s93, %s107
      %p109 = scmp.eq.s32.totalorder %s22, 0
      %p110 = por %p108, %p109
      %s112 = sadd.s32 %s111, 1
      %p115 = scmp.eq.s32.totalorder %s16, 1
      %p116 = scmp.ne.s32.totalorder %s111, %s113
      %p117 = scmp.eq.s32.totalorder %s16, 0
      %p118 = por %p116, %p117
      %p119 = scmp.ne.s32.totalorder %s111, %s113
      %p120 = scmp.eq.s32.totalorder %s21, 1
      %p121 = por %p119, %p120
      %p122 = scmp.ne.s32.totalorder %s113, %s114
      %p123 = scmp.eq.s32.totalorder %s21, 0
      %p124 = por %p122, %p123
      %p125 = scmp.ne.s32.totalorder %s113, %s114
      %p126 = scmp.eq.s32.totalorder %s22, 1
      %p127 = por %p125, %p126
      %p129 = scmp.ne.s32.totalorder %s114, %s128
      %p130 = scmp.eq.s32.totalorder %s22, 0
      %p131 = por %p129, %p130
      %s133 = sadd.s32 %s132, 1
      %p136 = scmp.eq.s32.totalorder %s16, 1
      %p137 = scmp.ne.s32.totalorder %s132, %s134
      %p138 = scmp.eq.s32.totalorder %s16, 0
      %p139 = por %p137, %p138
      %p140 = scmp.ne.s32.totalorder %s132, %s134
      %p141 = scmp.eq.s32.totalorder %s21, 1
      %p142 = por %p140, %p141
      %p143 = scmp.ne.s32.totalorder %s134, %s135
      %p144 = scmp.eq.s32.totalorder %s21, 0
      %p145 = por %p143, %p144
      %p146 = scmp.ne.s32.totalorder %s134, %s135
      %p147 = scmp.eq.s32.totalorder %s22, 1
      %p148 = por %p146, %p147
      %p150 = scmp.ne.s32.totalorder %s135, %s149
      %p151 = scmp.eq.s32.totalorder %s22, 0
      %p152 = por %p150, %p151
      %s154 = sadd.s32 %s153, 1
      %p157 = scmp.eq.s32.totalorder %s16, 1
      %p158 = scmp.ne.s32.totalorder %s153, %s155
      %p159 = scmp.eq.s32.totalorder %s16, 0
      %p160 = por %p158, %p159
      %p161 = scmp.ne.s32.totalorder %s153, %s155
      %p162 = scmp.eq.s32.totalorder %s21, 1
      %p163 = por %p161, %p162
      %p164 = scmp.ne.s32.totalorder %s155, %s156
      %p165 = scmp.eq.s32.totalorder %s21, 0
      %p166 = por %p164, %p165
      %p167 = scmp.ne.s32.totalorder %s155, %s156
      %p168 = scmp.eq.s32.totalorder %s22, 1
      %p169 = por %p167, %p168
      %p171 = scmp.ne.s32.totalorder %s156, %s170
      %p172 = scmp.eq.s32.totalorder %s22, 0
      %p173 = por %p171, %p172
      %s175 = sadd.s32 %s174, 1
      %p178 = scmp.eq.s32.totalorder %s16, 1
      %p179 = scmp.ne.s32.totalorder %s174, %s176
      %p180 = scmp.eq.s32.totalorder %s16, 0
      %p181 = por %p179, %p180
      %p182 = scmp.ne.s32.totalorder %s174, %s176
      %p183 = scmp.eq.s32.totalorder %s21, 1
      %p184 = por %p182, %p183
      %p185 = scmp.ne.s32.totalorder %s176, %s177
      %p186 = scmp.eq.s32.totalorder %s21, 0
      %p187 = por %p185, %p186
      %p188 = scmp.ne.s32.totalorder %s176, %s177
      %p189 = scmp.eq.s32.totalorder %s22, 1
      %p190 = por %p188, %p189
      %p192 = scmp.ne.s32.totalorder %s177, %s191
      %p193 = scmp.eq.s32.totalorder %s22, 0
      %p194 = por %p192, %p193
      %s195 = ssub.s32 %s23, %s35
      %s196 = ssub.s32 %s24, %s31
      %s197 = sor.u32 %s195, %s196
      %p198 = scmp.eq.s32.totalorder %s197, 0
      %s200 = sadd.s32 %s199, 1
      %s201 = scalar_select %p198, %s199, %s200
      %p204 = pneg %p198
      %p205 = scmp.eq.s32.totalorder %s16, 1
      %p206 = por %p204, %p205
      %p207 = scmp.ne.s32.totalorder %s199, %s202
      %p208 = scmp.eq.s32.totalorder %s16, 0
      %p209 = por %p207, %p208
      %p210 = scmp.ne.s32.totalorder %s199, %s202
      %p211 = scmp.eq.s32.totalorder %s21, 1
      %p212 = por %p210, %p211
      %p213 = scmp.ne.s32.totalorder %s202, %s203
      %p214 = scmp.eq.s32.totalorder %s21, 0
      %p215 = por %p213, %p214
      %p216 = scmp.ne.s32.totalorder %s202, %s203
      %p217 = scmp.eq.s32.totalorder %s22, 1
      %p218 = por %p216, %p217
      %p220 = scmp.ne.s32.totalorder %s203, %s219
      %p221 = scmp.eq.s32.totalorder %s22, 0
      %p222 = por %p220, %p221
      %p223 = scmp.le.s32.totalorder 1, %s16
      %p224 = scmp.lt.s32.totalorder %s16, 3
      %p225 = pnand %p223, %p224
      %p226 = pneg %p225
      // Predicated region
      $region9: #{tpu_custom_call.1} parent=5 // pred_check
        _
      $region10: #{tpu_custom_call.1} parent=5 // pred_check_branch
        %228 = sbr.rel (%p225) target = $region12
      $region11: #{tpu_custom_call.1} parent=5 // pred_region
        %s229 = ssub.s32 %s16, 1
        // Predicated region
        $region13: #{tpu_custom_call.1} parent=11 // pred_check
          %p230 = pneg %p103
        $region14: #{tpu_custom_call.1} parent=11 // pred_check_branch
          %232 = sbr.rel (%p230) target = $region16
        $region15: #{tpu_custom_call.1} parent=11 // pred_region
          _
        $region16: #{tpu_custom_call.1} parent=11 // pred_fallthru
          _
        // Predicated region
        $region17: #{tpu_custom_call.1} parent=11 // pred_check
          %p233 = pneg %p124
        $region18: #{tpu_custom_call.1} parent=11 // pred_check_branch
          %235 = sbr.rel (%p233) target = $region20
        $region19: #{tpu_custom_call.1} parent=11 // pred_region
          _
        $region20: #{tpu_custom_call.1} parent=11 // pred_fallthru
          _
        // Predicated region
        $region21: #{tpu_custom_call.1} parent=11 // pred_check
          %p236 = pneg %p145
        $region22: #{tpu_custom_call.1} parent=11 // pred_check_branch
          %238 = sbr.rel (%p236) target = $region24
        $region23: #{tpu_custom_call.1} parent=11 // pred_region
          _
        $region24: #{tpu_custom_call.1} parent=11 // pred_fallthru
          _
        // Predicated region
        $region25: #{tpu_custom_call.1} parent=11 // pred_check
          %p239 = pneg %p166
        $region26: #{tpu_custom_call.1} parent=11 // pred_check_branch
          %241 = sbr.rel (%p239) target = $region28
        $region27: #{tpu_custom_call.1} parent=11 // pred_region
          _
        $region28: #{tpu_custom_call.1} parent=11 // pred_fallthru
          _
        // Predicated region
        $region29: #{tpu_custom_call.1} parent=11 // pred_check
          %p242 = pneg %p187
        $region30: #{tpu_custom_call.1} parent=11 // pred_check_branch
          %244 = sbr.rel (%p242) target = $region32
        $region31: #{tpu_custom_call.1} parent=11 // pred_region
          _
        $region32: #{tpu_custom_call.1} parent=11 // pred_fallthru
          _
      $region12: #{tpu_custom_call.1} parent=5 // pred_fallthru
        _
      %p245 = scmp.lt.s32.totalorder %s16, 2
      // Predicated region
      $region33: #{tpu_custom_call.1} parent=5 // pred_check
        %p246 = pneg %p245
      $region34: #{tpu_custom_call.1} parent=5 // pred_check_branch
        %248 = sbr.rel (%p246) target = $region36
      $region35: #{tpu_custom_call.1} parent=5 // pred_region
        // Predicated region
        $region37: #{tpu_custom_call.1} parent=35 // pred_check
          %p249 = pneg %p50
        $region38: #{tpu_custom_call.1} parent=35 // pred_check_branch
          %251 = sbr.rel (%p249) target = $region40
        $region39: #{tpu_custom_call.1} parent=35 // pred_region
          %p252 = scmp.lt.s32.totalorder %s23, 1
          %s253 = scalar_select %p252, %s23, 1
          %p254 = scmp.lt.s32.totalorder %s24, 0
          %s255 = scalar_select %p254, %s24, 0
          %s256 = sadd.s32 %s255, %s253
          %s257 = smul.addr %s256, 8
          %s258 = scalar_lea.vmem %s0, %s257
        $region40: #{tpu_custom_call.1} parent=35 // pred_fallthru
          _
        // Predicated region
        $region41: #{tpu_custom_call.1} parent=35 // pred_check
          %p259 = pneg %p76
        $region42: #{tpu_custom_call.1} parent=35 // pred_check_branch
          %261 = sbr.rel (%p259) target = $region44
        $region43: #{tpu_custom_call.1} parent=35 // pred_region
          %p262 = scmp.lt.s32.totalorder %s23, 1
          %s263 = scalar_select %p262, %s23, 1
          %s264 = smul.addr %s263, 8
          %s265 = scalar_lea.vmem %s1, %s264
        $region44: #{tpu_custom_call.1} parent=35 // pred_fallthru
          _
      $region36: #{tpu_custom_call.1} parent=5 // pred_fallthru
        _
      %p266 = scmp.le.s32.totalorder 1, %s16
      %p267 = scmp.lt.s32.totalorder %s16, 3
      %p268 = pnand %p266, %p267
      %p269 = pneg %p268
      // Predicated region
      $region45: #{tpu_custom_call.1} parent=5 // pred_check
        _
      $region46: #{tpu_custom_call.1} parent=5 // pred_check_branch
        %271 = sbr.rel (%p268) target = $region48
      $region47: #{tpu_custom_call.1} parent=5 // pred_region
        %s272 = ssub.s32 %s16, 1
        %p273 = scmp.lt.s32.totalorder %s25, 1
        %s274 = scalar_select %p273, %s25, 1
        %p275 = scmp.lt.s32.totalorder %s26, 0
        %s276 = scalar_select %p275, %s26, 0
        %s277 = sadd.s32 %s276, %s274
        %s278 = smul.addr %s277, 8
        %s279 = scalar_lea.vmem %s0, %s278
        %p280 = pneg %p56
        %p281 = pneg %p53
        %p282 = scmp.lt.s32.totalorder %s25, 1
        %s283 = scalar_select %p282, %s25, 1
        %s284 = smul.addr %s283, 8
        %s285 = scalar_lea.vmem %s1, %s284
        %p286 = pneg %p82
        %p287 = pneg %p79
        %p288 = pneg %p103
        %p289 = pneg %p100
        %p290 = pneg %p124
        %p291 = pneg %p121
        %p292 = pneg %p145
        %p293 = pneg %p142
        %p294 = pneg %p166
        %p295 = pneg %p163
        %p296 = pneg %p187
        %p297 = pneg %p184
        %p298 = pneg %p215
        %p299 = pneg %p212
        %s300 = sand.u32 %s202, 1
        %s301 = scalar_lea.sflag [#allocation3], %s300
        %s302 = sand.u32 %s202, 1
        %s303 = smul.addr %s302, 8
        %s304 = scalar_lea.vmem [#allocation2], %s303
        %p305 = scmp.lt.s32.totalorder %s25, 1
        %s306 = scalar_select %p305, %s25, 1
        %p307 = scmp.lt.s32.totalorder %s26, 0
        %s308 = scalar_select %p307, %s26, 0
        %s309 = sadd.s32 %s308, %s306
        %s310 = smul.addr %s309, 8
        %s311 = scalar_lea.vmem %s0, %s310
        %p312 = scmp.lt.s32.totalorder %s25, 1
        %s313 = scalar_select %p312, %s25, 1
        %s314 = smul.addr %s313, 8
        %s315 = scalar_lea.vmem %s1, %s314
        %v317 = vld [vmem:[%s311] sm:$0xff]
        %v318 = vpack.c.bf16 %v317, %v317
        %v319 = vld [vmem:[%s315] sm:$0xff]
        %v320 = vpack.c.bf16 %v319, %v319
        %v321 = vld [vmem:[%s2] sm:$0xff]
        %v322 = vld [vmem:[%s2 + $0x8] sm:$0xff]
        %v323 = vld [vmem:[%s2 + $0x10] sm:$0xff]
        %v324 = vld [vmem:[%s2 + $0x18] sm:$0xff]
        %v325 = vld [vmem:[%s2 + $0x20] sm:$0xff]
        %v326 = vld [vmem:[%s2 + $0x28] sm:$0xff]
        %v327 = vld [vmem:[%s2 + $0x30] sm:$0xff]
        %v328 = vld [vmem:[%s2 + $0x38] sm:$0xff]
        %v329 = vld [vmem:[%s2 + $0x40] sm:$0xff]
        %v330 = vld [vmem:[%s2 + $0x48] sm:$0xff]
        %v331 = vld [vmem:[%s2 + $0x50] sm:$0xff]
        %v332 = vld [vmem:[%s2 + $0x58] sm:$0xff]
        %v333 = vld [vmem:[%s2 + $0x60] sm:$0xff]
        %v334 = vld [vmem:[%s2 + $0x68] sm:$0xff]
        %v335 = vld [vmem:[%s2 + $0x70] sm:$0xff]
        %v336 = vld [vmem:[%s2 + $0x78] sm:$0xff]
        %v337 = vpack.c.bf16 %v322, %v321
        %v338 = vpack.c.bf16 %v324, %v323
        %v339 = vpack.c.bf16 %v326, %v325
        %v340 = vpack.c.bf16 %v328, %v327
        %v341 = vpack.c.bf16 %v330, %v329
        %v342 = vpack.c.bf16 %v332, %v331
        %v343 = vpack.c.bf16 %v334, %v333
        %v344 = vpack.c.bf16 %v336, %v335
        %v345 = vld [vmem:[%s3] sm:$0xff]
        %v346 = vld [vmem:[%s3 + $0x8] sm:$0xff]
        %v347 = vld [vmem:[%s3 + $0x10] sm:$0xff]
        %v348 = vld [vmem:[%s3 + $0x18] sm:$0xff]
        %v349 = vld [vmem:[%s3 + $0x20] sm:$0xff]
        %v350 = vld [vmem:[%s3 + $0x28] sm:$0xff]
        %v351 = vld [vmem:[%s3 + $0x30] sm:$0xff]
        %v352 = vld [vmem:[%s3 + $0x38] sm:$0xff]
        %v353 = vld [vmem:[%s3 + $0x40] sm:$0xff]
        %v354 = vld [vmem:[%s3 + $0x48] sm:$0xff]
        %v355 = vld [vmem:[%s3 + $0x50] sm:$0xff]
        %v356 = vld [vmem:[%s3 + $0x58] sm:$0xff]
        %v357 = vld [vmem:[%s3 + $0x60] sm:$0xff]
        %v358 = vld [vmem:[%s3 + $0x68] sm:$0xff]
        %v359 = vld [vmem:[%s3 + $0x70] sm:$0xff]
        %v360 = vld [vmem:[%s3 + $0x78] sm:$0xff]
        %v361 = vpack.c.bf16 %v346, %v345
        %v362 = vpack.c.bf16 %v348, %v347
        %v363 = vpack.c.bf16 %v350, %v349
        %v364 = vpack.c.bf16 %v352, %v351
        %v365 = vpack.c.bf16 %v354, %v353
        %v366 = vpack.c.bf16 %v356, %v355
        %v367 = vpack.c.bf16 %v358, %v357
        %v368 = vpack.c.bf16 %v360, %v359
        %v369 = vld [vmem:[%s4] sm:$0xff]
        %v370 = vld [vmem:[%s4 + $0x8] sm:$0xff]
        %v371 = vld [vmem:[%s4 + $0x10] sm:$0xff]
        %v372 = vld [vmem:[%s4 + $0x18] sm:$0xff]
        %v373 = vld [vmem:[%s4 + $0x20] sm:$0xff]
        %v374 = vld [vmem:[%s4 + $0x28] sm:$0xff]
        %v375 = vld [vmem:[%s4 + $0x30] sm:$0xff]
        %v376 = vld [vmem:[%s4 + $0x38] sm:$0xff]
        %v377 = vld [vmem:[%s4 + $0x40] sm:$0xff]
        %v378 = vld [vmem:[%s4 + $0x48] sm:$0xff]
        %v379 = vld [vmem:[%s4 + $0x50] sm:$0xff]
        %v380 = vld [vmem:[%s4 + $0x58] sm:$0xff]
        %v381 = vld [vmem:[%s4 + $0x60] sm:$0xff]
        %v382 = vld [vmem:[%s4 + $0x68] sm:$0xff]
        %v383 = vld [vmem:[%s4 + $0x70] sm:$0xff]
        %v384 = vld [vmem:[%s4 + $0x78] sm:$0xff]
        %v385 = vpack.c.bf16 %v370, %v369
        %v386 = vpack.c.bf16 %v372, %v371
        %v387 = vpack.c.bf16 %v374, %v373
        %v388 = vpack.c.bf16 %v376, %v375
        %v389 = vpack.c.bf16 %v378, %v377
        %v390 = vpack.c.bf16 %v380, %v379
        %v391 = vpack.c.bf16 %v382, %v381
        %v392 = vpack.c.bf16 %v384, %v383
        %393 = vmatprep.subr.bf16.mxu0 0
        %394 = vmatpush1.bf16.msra.mxu0 %v344
        %395 = vmatprep.subr.bf16.mxu0 0
        %396 = vmatpush1.bf16.msra.mxu0 %v343
        %397 = vmatprep.subr.bf16.mxu0 0
        %398 = vmatpush1.bf16.msra.mxu0 %v342
        %399 = vmatprep.subr.bf16.mxu0 0
        %400 = vmatpush1.bf16.msra.mxu0 %v341
        %401 = vmatprep.subr.bf16.mxu0 0
        %402 = vmatpush1.bf16.msra.mxu0 %v340
        %403 = vmatprep.subr.bf16.mxu0 0
        %404 = vmatpush1.bf16.msra.mxu0 %v339
        %405 = vmatprep.subr.bf16.mxu0 0
        %406 = vmatpush1.bf16.msra.mxu0 %v338
        %407 = vmatprep.subr.bf16.mxu0 0
        %408 = vmatpush1.bf16.msra.mxu0 %v337
        %409 = vmatprep.subr.bf16.mxu0 0
        %410 = vmatpush2.bf16.msra.mxu0 0
        %411 = vmatprep.subr.bf16.mxu0 0
        %412 = vmatpush2.bf16.msra.mxu0 0
        %413 = vmatprep.subr.bf16.mxu0 0
        %414 = vmatpush2.bf16.msra.mxu0 0
        %415 = vmatprep.subr.bf16.mxu0 0
        %416 = vmatpush2.bf16.msra.mxu0 0
        %417 = vmatprep.subr.bf16.mxu0 0
        %418 = vmatpush2.bf16.msra.mxu0 0
        %419 = vmatprep.subr.bf16.mxu0 0
        %420 = vmatpush2.bf16.msra.mxu0 0
        %421 = vmatprep.subr.bf16.mxu0 0
        %422 = vmatpush2.bf16.msra.mxu0 0
        %423 = vmatprep.subr.bf16.mxu0 0
        %424 = vmatpush2.bf16.msra.mxu0 0
        %425 = vmatprep.mubr.bf16.mxu0 0
        %426 = vmatmul.mubr.bf16.gmra.mxu0 %v318
        %v427 = vpop.f32.mrf.mxu0
        %v428 = vadd.f32 0.0, %v427
        %v429 = vpop.f32.mrf.mxu0
        %v430 = vpop.f32.mrf.mxu0
        %v431 = vpop.f32.mrf.mxu0
        %432 = vdwg.mxu0
        %433 = vmatprep.subr.bf16.mxu0 0
        %434 = vmatpush1.bf16.msra.mxu0 %v368
        %435 = vmatprep.subr.bf16.mxu0 0
        %436 = vmatpush1.bf16.msra.mxu0 %v367
        %437 = vmatprep.subr.bf16.mxu0 0
        %438 = vmatpush1.bf16.msra.mxu0 %v366
        %439 = vmatprep.subr.bf16.mxu0 0
        %440 = vmatpush1.bf16.msra.mxu0 %v365
        %441 = vmatprep.subr.bf16.mxu0 0
        %442 = vmatpush1.bf16.msra.mxu0 %v364
        %443 = vmatprep.subr.bf16.mxu0 0
        %444 = vmatpush1.bf16.msra.mxu0 %v363
        %445 = vmatprep.subr.bf16.mxu0 0
        %446 = vmatpush1.bf16.msra.mxu0 %v362
        %447 = vmatprep.subr.bf16.mxu0 0
        %448 = vmatpush1.bf16.msra.mxu0 %v361
        %449 = vmatprep.subr.bf16.mxu0 0
        %450 = vmatpush2.bf16.msra.mxu0 0
        %451 = vmatprep.subr.bf16.mxu0 0
        %452 = vmatpush2.bf16.msra.mxu0 0
        %453 = vmatprep.subr.bf16.mxu0 0
        %454 = vmatpush2.bf16.msra.mxu0 0
        %455 = vmatprep.subr.bf16.mxu0 0
        %456 = vmatpush2.bf16.msra.mxu0 0
        %457 = vmatprep.subr.bf16.mxu0 0
        %458 = vmatpush2.bf16.msra.mxu0 0
        %459 = vmatprep.subr.bf16.mxu0 0
        %460 = vmatpush2.bf16.msra.mxu0 0
        %461 = vmatprep.subr.bf16.mxu0 0
        %462 = vmatpush2.bf16.msra.mxu0 0
        %463 = vmatprep.subr.bf16.mxu0 0
        %464 = vmatpush2.bf16.msra.mxu0 0
        %465 = vmatprep.mubr.bf16.mxu0 0
        %466 = vmatmul.mubr.bf16.gmra.mxu0 %v320
        %v467 = vpop.f32.mrf.mxu0
        %v468 = vadd.f32 0.0, %v467
        %v469 = vpop.f32.mrf.mxu0
        %v470 = vpop.f32.mrf.mxu0
        %v471 = vpop.f32.mrf.mxu0
        %472 = vdwg.mxu0
        %473 = vmatprep.subr.bf16.mxu0 0
        %474 = vmatpush1.bf16.msra.mxu0 %v392
        %475 = vmatprep.subr.bf16.mxu0 0
        %476 = vmatpush1.bf16.msra.mxu0 %v391
        %477 = vmatprep.subr.bf16.mxu0 0
        %478 = vmatpush1.bf16.msra.mxu0 %v390
        %479 = vmatprep.subr.bf16.mxu0 0
        %480 = vmatpush1.bf16.msra.mxu0 %v389
        %481 = vmatprep.subr.bf16.mxu0 0
        %482 = vmatpush1.bf16.msra.mxu0 %v388
        %483 = vmatprep.subr.bf16.mxu0 0
        %484 = vmatpush1.bf16.msra.mxu0 %v387
        %485 = vmatprep.subr.bf16.mxu0 0
        %486 = vmatpush1.bf16.msra.mxu0 %v386
        %487 = vmatprep.subr.bf16.mxu0 0
        %488 = vmatpush1.bf16.msra.mxu0 %v385
        %489 = vmatprep.subr.bf16.mxu0 0
        %490 = vmatpush2.bf16.msra.mxu0 0
        %491 = vmatprep.subr.bf16.mxu0 0
        %492 = vmatpush2.bf16.msra.mxu0 0
        %493 = vmatprep.subr.bf16.mxu0 0
        %494 = vmatpush2.bf16.msra.mxu0 0
        %495 = vmatprep.subr.bf16.mxu0 0
        %496 = vmatpush2.bf16.msra.mxu0 0
        %497 = vmatprep.subr.bf16.mxu0 0
        %498 = vmatpush2.bf16.msra.mxu0 0
        %499 = vmatprep.subr.bf16.mxu0 0
        %500 = vmatpush2.bf16.msra.mxu0 0
        %501 = vmatprep.subr.bf16.mxu0 0
        %502 = vmatpush2.bf16.msra.mxu0 0
        %503 = vmatprep.subr.bf16.mxu0 0
        %504 = vmatpush2.bf16.msra.mxu0 0
        %505 = vmatprep.mubr.bf16.mxu0 0
        %506 = vmatmul.mubr.bf16.gmra.mxu0 %v320
        %v507 = vpop.f32.mrf.mxu0
        %v508 = vadd.f32 0.0, %v507
        %v509 = vpop.f32.mrf.mxu0
        %v510 = vpop.f32.mrf.mxu0
        %v511 = vpop.f32.mrf.mxu0
        %512 = vdwg.mxu0
        %v513 = vmul.f32 %v428, 0.25
        %515 = vrot.lane.b32.xlu0 %v513, 112
        %v516 = vpop.permute.xlu0 %515
        %518 = vrot.lane.b32.xlu0 %v513, 96
        %v519 = vpop.permute.xlu0 %518
        %521 = vrot.lane.b32.xlu0 %v513, 80
        %v522 = vpop.permute.xlu0 %521
        %v524 = vcombine.low %v513, %v519
        %v525 = vcombine.high %v513, %v519
        %v527 = vunpack.c.l.s4 1983009808
        %v528 = vunpack.c.0.s8 %v527
        %v529 = vlaneseq
        %v530 = vshrl.u32 %v529, 7
        %v531 = vsub.s32 %v528, %v530
        %v532 = vrot.slane %v524, %v531
        %v534 = vunpack.c.l.s4 1983009808
        %v535 = vunpack.c.0.s8 %v534
        %v536 = vlaneseq
        %v537 = vshrl.u32 %v536, 7
        %v538 = vsub.s32 %v535, %v537
        %v539 = vrot.slane %v525, %v538
        %v540 = vcombine.low %v516, %v522
        %v541 = vcombine.high %v516, %v522
        %v543 = vunpack.c.l.s4 1983009808
        %v544 = vunpack.c.0.s8 %v543
        %v545 = vlaneseq
        %v546 = vshrl.u32 %v545, 7
        %v547 = vsub.s32 %v544, %v546
        %v548 = vrot.slane %v540, %v547
        %v550 = vunpack.c.l.s4 1983009808
        %v551 = vunpack.c.0.s8 %v550
        %v552 = vlaneseq
        %v553 = vshrl.u32 %v552, 7
        %v554 = vsub.s32 %v551, %v553
        %v555 = vrot.slane %v541, %v554
        %v556 = vcombine.low %v532, %v548
        %v557 = vcombine.high %v532, %v548
        %v559 = vunpack.c.l.s4 1934713408
        %v560 = vunpack.c.0.s8 %v559
        %v561 = vlaneseq
        %v562 = vshrl.u32 %v561, 7
        %v563 = vsub.s32 %v560, %v562
        %v564 = vrot.slane %v556, %v563
        %v566 = vunpack.c.l.s4 1934713408
        %v567 = vunpack.c.0.s8 %v566
        %v568 = vlaneseq
        %v569 = vshrl.u32 %v568, 7
        %v570 = vsub.s32 %v567, %v569
        %v571 = vrot.slane %v557, %v570
        %v572 = vcombine.low %v539, %v555
        %v573 = vcombine.high %v539, %v555
        %v575 = vunpack.c.l.s4 1934713408
        %v576 = vunpack.c.0.s8 %v575
        %v577 = vlaneseq
        %v578 = vshrl.u32 %v577, 7
        %v579 = vsub.s32 %v576, %v578
        %v580 = vrot.slane %v572, %v579
        %v582 = vunpack.c.l.s4 1934713408
        %v583 = vunpack.c.0.s8 %v582
        %v584 = vlaneseq
        %v585 = vshrl.u32 %v584, 7
        %v586 = vsub.s32 %v583, %v585
        %v587 = vrot.slane %v573, %v586
        %v588 = vcombine.high %v564, 0.0
        %v589 = vcombine.high %v571, 0.0
        %v590 = vcombine.high %v580, 0.0
        %v591 = vcombine.high %v587, 0.0
        %v592 = vcombine.low %v564, %v571
        %v594 = vunpack.c.l.s4 1983009808
        %v595 = vunpack.c.0.s8 %v594
        %v596 = vlaneseq
        %v597 = vshrl.u32 %v596, 7
        %v598 = vsub.s32 %v595, %v597
        %v599 = vrot.slane %v592, %v598
        %v600 = vcombine.low %v588, %v589
        %v602 = vunpack.c.l.s4 1983009808
        %v603 = vunpack.c.0.s8 %v602
        %v604 = vlaneseq
        %v605 = vshrl.u32 %v604, 7
        %v606 = vsub.s32 %v603, %v605
        %v607 = vrot.slane %v600, %v606
        %v608 = vcombine.low %v580, %v587
        %v610 = vunpack.c.l.s4 1983009808
        %v611 = vunpack.c.0.s8 %v610
        %v612 = vlaneseq
        %v613 = vshrl.u32 %v612, 7
        %v614 = vsub.s32 %v611, %v613
        %v615 = vrot.slane %v608, %v614
        %v616 = vcombine.low %v590, %v591
        %v618 = vunpack.c.l.s4 1983009808
        %v619 = vunpack.c.0.s8 %v618
        %v620 = vlaneseq
        %v621 = vshrl.u32 %v620, 7
        %v622 = vsub.s32 %v619, %v621
        %v623 = vrot.slane %v616, %v622
        %v624 = vcombine.low %v599, %v607
        %v625 = vcombine.high %v599, %v607
        %v627 = vunpack.c.l.s4 1934713408
        %v628 = vunpack.c.0.s8 %v627
        %v629 = vlaneseq
        %v630 = vshrl.u32 %v629, 7
        %v631 = vsub.s32 %v628, %v630
        %v632 = vrot.slane %v624, %v631
        %v634 = vunpack.c.l.s4 1934713408
        %v635 = vunpack.c.0.s8 %v634
        %v636 = vlaneseq
        %v637 = vshrl.u32 %v636, 7
        %v638 = vsub.s32 %v635, %v637
        %v639 = vrot.slane %v625, %v638
        %v640 = vcombine.low %v615, %v623
        %v641 = vcombine.high %v615, %v623
        %v643 = vunpack.c.l.s4 1934713408
        %v644 = vunpack.c.0.s8 %v643
        %v645 = vlaneseq
        %v646 = vshrl.u32 %v645, 7
        %v647 = vsub.s32 %v644, %v646
        %v648 = vrot.slane %v640, %v647
        %v650 = vunpack.c.l.s4 1934713408
        %v651 = vunpack.c.0.s8 %v650
        %v652 = vlaneseq
        %v653 = vshrl.u32 %v652, 7
        %v654 = vsub.s32 %v651, %v653
        %v655 = vrot.slane %v641, %v654
        %v656 = vcombine.low %v632, %v648
        %v657 = vcombine.high %v632, %v648
        %v658 = vcombine.low %v639, %v655
        %v659 = vcombine.high %v639, %v655
        %v660 = vpack.c.bf16 %v656, %v656
        %v661 = vpack.c.bf16 %v657, %v657
        %v662 = vpack.c.bf16 %v658, %v658
        %v663 = vpack.c.bf16 %v659, %v659
        %665 = vrot.lane.b32.xlu0 %v468, 112
        %v666 = vpop.permute.xlu0 %665
        %668 = vrot.lane.b32.xlu0 %v468, 96
        %v669 = vpop.permute.xlu0 %668
        %671 = vrot.lane.b32.xlu0 %v468, 80
        %v672 = vpop.permute.xlu0 %671
        %v674 = vcombine.low %v468, %v669
        %v675 = vcombine.high %v468, %v669
        %v677 = vunpack.c.l.s4 1983009808
        %v678 = vunpack.c.0.s8 %v677
        %v679 = vlaneseq
        %v680 = vshrl.u32 %v679, 7
        %v681 = vsub.s32 %v678, %v680
        %v682 = vrot.slane %v674, %v681
        %v684 = vunpack.c.l.s4 1983009808
        %v685 = vunpack.c.0.s8 %v684
        %v686 = vlaneseq
        %v687 = vshrl.u32 %v686, 7
        %v688 = vsub.s32 %v685, %v687
        %v689 = vrot.slane %v675, %v688
        %v690 = vcombine.low %v666, %v672
        %v691 = vcombine.high %v666, %v672
        %v693 = vunpack.c.l.s4 1983009808
        %v694 = vunpack.c.0.s8 %v693
        %v695 = vlaneseq
        %v696 = vshrl.u32 %v695, 7
        %v697 = vsub.s32 %v694, %v696
        %v698 = vrot.slane %v690, %v697
        %v700 = vunpack.c.l.s4 1983009808
        %v701 = vunpack.c.0.s8 %v700
        %v702 = vlaneseq
        %v703 = vshrl.u32 %v702, 7
        %v704 = vsub.s32 %v701, %v703
        %v705 = vrot.slane %v691, %v704
        %v706 = vcombine.low %v682, %v698
        %v707 = vcombine.high %v682, %v698
        %v709 = vunpack.c.l.s4 1934713408
        %v710 = vunpack.c.0.s8 %v709
        %v711 = vlaneseq
        %v712 = vshrl.u32 %v711, 7
        %v713 = vsub.s32 %v710, %v712
        %v714 = vrot.slane %v706, %v713
        %v716 = vunpack.c.l.s4 1934713408
        %v717 = vunpack.c.0.s8 %v716
        %v718 = vlaneseq
        %v719 = vshrl.u32 %v718, 7
        %v720 = vsub.s32 %v717, %v719
        %v721 = vrot.slane %v707, %v720
        %v722 = vcombine.low %v689, %v705
        %v723 = vcombine.high %v689, %v705
        %v725 = vunpack.c.l.s4 1934713408
        %v726 = vunpack.c.0.s8 %v725
        %v727 = vlaneseq
        %v728 = vshrl.u32 %v727, 7
        %v729 = vsub.s32 %v726, %v728
        %v730 = vrot.slane %v722, %v729
        %v732 = vunpack.c.l.s4 1934713408
        %v733 = vunpack.c.0.s8 %v732
        %v734 = vlaneseq
        %v735 = vshrl.u32 %v734, 7
        %v736 = vsub.s32 %v733, %v735
        %v737 = vrot.slane %v723, %v736
        %v738 = vcombine.high %v714, 0.0
        %v739 = vcombine.high %v721, 0.0
        %v740 = vcombine.high %v730, 0.0
        %v741 = vcombine.high %v737, 0.0
        %v742 = vcombine.low %v714, %v721
        %v744 = vunpack.c.l.s4 1983009808
        %v745 = vunpack.c.0.s8 %v744
        %v746 = vlaneseq
        %v747 = vshrl.u32 %v746, 7
        %v748 = vsub.s32 %v745, %v747
        %v749 = vrot.slane %v742, %v748
        %v750 = vcombine.low %v738, %v739
        %v752 = vunpack.c.l.s4 1983009808
        %v753 = vunpack.c.0.s8 %v752
        %v754 = vlaneseq
        %v755 = vshrl.u32 %v754, 7
        %v756 = vsub.s32 %v753, %v755
        %v757 = vrot.slane %v750, %v756
        %v758 = vcombine.low %v730, %v737
        %v760 = vunpack.c.l.s4 1983009808
        %v761 = vunpack.c.0.s8 %v760
        %v762 = vlaneseq
        %v763 = vshrl.u32 %v762, 7
        %v764 = vsub.s32 %v761, %v763
        %v765 = vrot.slane %v758, %v764
        %v766 = vcombine.low %v740, %v741
        %v768 = vunpack.c.l.s4 1983009808
        %v769 = vunpack.c.0.s8 %v768
        %v770 = vlaneseq
        %v771 = vshrl.u32 %v770, 7
        %v772 = vsub.s32 %v769, %v771
        %v773 = vrot.slane %v766, %v772
        %v774 = vcombine.low %v749, %v757
        %v775 = vcombine.high %v749, %v757
        %v777 = vunpack.c.l.s4 1934713408
        %v778 = vunpack.c.0.s8 %v777
        %v779 = vlaneseq
        %v780 = vshrl.u32 %v779, 7
        %v781 = vsub.s32 %v778, %v780
        %v782 = vrot.slane %v774, %v781
        %v784 = vunpack.c.l.s4 1934713408
        %v785 = vunpack.c.0.s8 %v784
        %v786 = vlaneseq
        %v787 = vshrl.u32 %v786, 7
        %v788 = vsub.s32 %v785, %v787
        %v789 = vrot.slane %v775, %v788
        %v790 = vcombine.low %v765, %v773
        %v791 = vcombine.high %v765, %v773
        %v793 = vunpack.c.l.s4 1934713408
        %v794 = vunpack.c.0.s8 %v793
        %v795 = vlaneseq
        %v796 = vshrl.u32 %v795, 7
        %v797 = vsub.s32 %v794, %v796
        %v798 = vrot.slane %v790, %v797
        %v800 = vunpack.c.l.s4 1934713408
        %v801 = vunpack.c.0.s8 %v800
        %v802 = vlaneseq
        %v803 = vshrl.u32 %v802, 7
        %v804 = vsub.s32 %v801, %v803
        %v805 = vrot.slane %v791, %v804
        %v806 = vcombine.low %v782, %v798
        %v807 = vcombine.high %v782, %v798
        %v808 = vcombine.low %v789, %v805
        %v809 = vcombine.high %v789, %v805
        %v810 = vpack.c.bf16 %v806, %v806
        %v811 = vpack.c.bf16 %v807, %v807
        %v812 = vpack.c.bf16 %v808, %v808
        %v813 = vpack.c.bf16 %v809, %v809
        %815 = vrot.lane.b32.xlu0 %v508, 112
        %v816 = vpop.permute.xlu0 %815
        %818 = vrot.lane.b32.xlu0 %v508, 96
        %v819 = vpop.permute.xlu0 %818
        %821 = vrot.lane.b32.xlu0 %v508, 80
        %v822 = vpop.permute.xlu0 %821
        %v824 = vcombine.low %v508, %v819
        %v825 = vcombine.high %v508, %v819
        %v827 = vunpack.c.l.s4 1983009808
        %v828 = vunpack.c.0.s8 %v827
        %v829 = vlaneseq
        %v830 = vshrl.u32 %v829, 7
        %v831 = vsub.s32 %v828, %v830
        %v832 = vrot.slane %v824, %v831
        %v834 = vunpack.c.l.s4 1983009808
        %v835 = vunpack.c.0.s8 %v834
        %v836 = vlaneseq
        %v837 = vshrl.u32 %v836, 7
        %v838 = vsub.s32 %v835, %v837
        %v839 = vrot.slane %v825, %v838
        %v840 = vcombine.low %v816, %v822
        %v841 = vcombine.high %v816, %v822
        %v843 = vunpack.c.l.s4 1983009808
        %v844 = vunpack.c.0.s8 %v843
        %v845 = vlaneseq
        %v846 = vshrl.u32 %v845, 7
        %v847 = vsub.s32 %v844, %v846
        %v848 = vrot.slane %v840, %v847
        %v850 = vunpack.c.l.s4 1983009808
        %v851 = vunpack.c.0.s8 %v850
        %v852 = vlaneseq
        %v853 = vshrl.u32 %v852, 7
        %v854 = vsub.s32 %v851, %v853
        %v855 = vrot.slane %v841, %v854
        %v856 = vcombine.low %v832, %v848
        %v857 = vcombine.high %v832, %v848
        %v859 = vunpack.c.l.s4 1934713408
        %v860 = vunpack.c.0.s8 %v859
        %v861 = vlaneseq
        %v862 = vshrl.u32 %v861, 7
        %v863 = vsub.s32 %v860, %v862
        %v864 = vrot.slane %v856, %v863
        %v866 = vunpack.c.l.s4 1934713408
        %v867 = vunpack.c.0.s8 %v866
        %v868 = vlaneseq
        %v869 = vshrl.u32 %v868, 7
        %v870 = vsub.s32 %v867, %v869
        %v871 = vrot.slane %v857, %v870
        %v872 = vcombine.low %v839, %v855
        %v873 = vcombine.high %v839, %v855
        %v875 = vunpack.c.l.s4 1934713408
        %v876 = vunpack.c.0.s8 %v875
        %v877 = vlaneseq
        %v878 = vshrl.u32 %v877, 7
        %v879 = vsub.s32 %v876, %v878
        %v880 = vrot.slane %v872, %v879
        %v882 = vunpack.c.l.s4 1934713408
        %v883 = vunpack.c.0.s8 %v882
        %v884 = vlaneseq
        %v885 = vshrl.u32 %v884, 7
        %v886 = vsub.s32 %v883, %v885
        %v887 = vrot.slane %v873, %v886
        %v888 = vcombine.high %v864, 0.0
        %v889 = vcombine.high %v871, 0.0
        %v890 = vcombine.high %v880, 0.0
        %v891 = vcombine.high %v887, 0.0
        %v892 = vcombine.low %v864, %v871
        %v894 = vunpack.c.l.s4 1983009808
        %v895 = vunpack.c.0.s8 %v894
        %v896 = vlaneseq
        %v897 = vshrl.u32 %v896, 7
        %v898 = vsub.s32 %v895, %v897
        %v899 = vrot.slane %v892, %v898
        %v900 = vcombine.low %v888, %v889
        %v902 = vunpack.c.l.s4 1983009808
        %v903 = vunpack.c.0.s8 %v902
        %v904 = vlaneseq
        %v905 = vshrl.u32 %v904, 7
        %v906 = vsub.s32 %v903, %v905
        %v907 = vrot.slane %v900, %v906
        %v908 = vcombine.low %v880, %v887
        %v910 = vunpack.c.l.s4 1983009808
        %v911 = vunpack.c.0.s8 %v910
        %v912 = vlaneseq
        %v913 = vshrl.u32 %v912, 7
        %v914 = vsub.s32 %v911, %v913
        %v915 = vrot.slane %v908, %v914
        %v916 = vcombine.low %v890, %v891
        %v918 = vunpack.c.l.s4 1983009808
        %v919 = vunpack.c.0.s8 %v918
        %v920 = vlaneseq
        %v921 = vshrl.u32 %v920, 7
        %v922 = vsub.s32 %v919, %v921
        %v923 = vrot.slane %v916, %v922
        %v924 = vcombine.low %v899, %v907
        %v925 = vcombine.high %v899, %v907
        %v927 = vunpack.c.l.s4 1934713408
        %v928 = vunpack.c.0.s8 %v927
        %v929 = vlaneseq
        %v930 = vshrl.u32 %v929, 7
        %v931 = vsub.s32 %v928, %v930
        %v932 = vrot.slane %v924, %v931
        %v934 = vunpack.c.l.s4 1934713408
        %v935 = vunpack.c.0.s8 %v934
        %v936 = vlaneseq
        %v937 = vshrl.u32 %v936, 7
        %v938 = vsub.s32 %v935, %v937
        %v939 = vrot.slane %v925, %v938
        %v940 = vcombine.low %v915, %v923
        %v941 = vcombine.high %v915, %v923
        %v943 = vunpack.c.l.s4 1934713408
        %v944 = vunpack.c.0.s8 %v943
        %v945 = vlaneseq
        %v946 = vshrl.u32 %v945, 7
        %v947 = vsub.s32 %v944, %v946
        %v948 = vrot.slane %v940, %v947
        %v950 = vunpack.c.l.s4 1934713408
        %v951 = vunpack.c.0.s8 %v950
        %v952 = vlaneseq
        %v953 = vshrl.u32 %v952, 7
        %v954 = vsub.s32 %v951, %v953
        %v955 = vrot.slane %v941, %v954
        %v956 = vcombine.low %v932, %v948
        %v957 = vcombine.high %v932, %v948
        %v958 = vcombine.low %v939, %v955
        %v959 = vcombine.high %v939, %v955
        %v960 = vpack.c.bf16 %v956, %v956
        %v961 = vpack.c.bf16 %v957, %v957
        %v962 = vpack.c.bf16 %v958, %v958
        %v963 = vpack.c.bf16 %v959, %v959
        %vm964 = vcmask 130048
        %v966 = vsel %vm964, %v660, 0
        %v969 = vsel %vm964, %v810, 0
        %971 = vmatprep.subr.bf16.mxu0 0
        %972 = vmatpush1.bf16.xpose.msra.mxu0 0
        %973 = vmatprep.subr.bf16.mxu0 0
        %974 = vmatpush1.bf16.xpose.msra.mxu0 0
        %975 = vmatprep.subr.bf16.mxu0 0
        %976 = vmatpush1.bf16.xpose.msra.mxu0 0
        %977 = vmatprep.subr.bf16.mxu0 0
        %978 = vmatpush1.bf16.xpose.msra.mxu0 0
        %979 = vmatprep.subr.bf16.mxu0 0
        %980 = vmatpush1.bf16.xpose.msra.mxu0 0
        %981 = vmatprep.subr.bf16.mxu0 0
        %982 = vmatpush1.bf16.xpose.msra.mxu0 0
        %983 = vmatprep.subr.bf16.mxu0 0
        %984 = vmatpush1.bf16.xpose.msra.mxu0 0
        %985 = vmatprep.subr.bf16.mxu0 0
        %986 = vmatpush1.bf16.xpose.msra.mxu0 %v969
        %987 = vmatprep.subr.bf16.mxu0 0
        %988 = vmatpush2.bf16.xpose.msra.mxu0 0
        %989 = vmatprep.subr.bf16.mxu0 0
        %990 = vmatpush2.bf16.xpose.msra.mxu0 0
        %991 = vmatprep.subr.bf16.mxu0 0
        %992 = vmatpush2.bf16.xpose.msra.mxu0 0
        %993 = vmatprep.subr.bf16.mxu0 0
        %994 = vmatpush2.bf16.xpose.msra.mxu0 0
        %995 = vmatprep.subr.bf16.mxu0 0
        %996 = vmatpush2.bf16.xpose.msra.mxu0 0
        %997 = vmatprep.subr.bf16.mxu0 0
        %998 = vmatpush2.bf16.xpose.msra.mxu0 0
        %999 = vmatprep.subr.bf16.mxu0 0
        %1000 = vmatpush2.bf16.xpose.msra.mxu0 0
        %1001 = vmatprep.subr.bf16.mxu0 0
        %1002 = vmatpush2.bf16.xpose.msra.mxu0 0
        %1003 = vmatprep.mubr.bf16.mxu0 0
        %1004 = vmatmul.mubr.bf16.gmra.mxu0 %v966
        %v1005 = vpop.f32.mrf.mxu0
        %v1006 = vadd.f32 0.0, %v1005
        %v1007 = vpop.f32.mrf.mxu0
        %v1008 = vpop.f32.mrf.mxu0
        %v1009 = vpop.f32.mrf.mxu0
        %1010 = vdwg.mxu0
        %v1012 = vsel %vm964, %v661, 0
        %v1015 = vsel %vm964, %v811, 0
        %1017 = vmatprep.subr.bf16.mxu0 0
        %1018 = vmatpush1.bf16.xpose.msra.mxu0 0
        %1019 = vmatprep.subr.bf16.mxu0 0
        %1020 = vmatpush1.bf16.xpose.msra.mxu0 0
        %1021 = vmatprep.subr.bf16.mxu0 0
        %1022 = vmatpush1.bf16.xpose.msra.mxu0 0
        %1023 = vmatprep.subr.bf16.mxu0 0
        %1024 = vmatpush1.bf16.xpose.msra.mxu0 0
        %1025 = vmatprep.subr.bf16.mxu0 0
        %1026 = vmatpush1.bf16.xpose.msra.mxu0 0
        %1027 = vmatprep.subr.bf16.mxu0 0
        %1028 = vmatpush1.bf16.xpose.msra.mxu0 0
        %1029 = vmatprep.subr.bf16.mxu0 0
        %1030 = vmatpush1.bf16.xpose.msra.mxu0 0
        %1031 = vmatprep.subr.bf16.mxu0 0
        %1032 = vmatpush1.bf16.xpose.msra.mxu0 %v1015
        %1033 = vmatprep.subr.bf16.mxu0 0
        %1034 = vmatpush2.bf16.xpose.msra.mxu0 0
        %1035 = vmatprep.subr.bf16.mxu0 0
        %1036 = vmatpush2.bf16.xpose.msra.mxu0 0
        %1037 = vmatprep.subr.bf16.mxu0 0
        %1038 = vmatpush2.bf16.xpose.msra.mxu0 0
        %1039 = vmatprep.subr.bf16.mxu0 0
        %1040 = vmatpush2.bf16.xpose.msra.mxu0 0
        %1041 = vmatprep.subr.bf16.mxu0 0
        %1042 = vmatpush2.bf16.xpose.msra.mxu0 0
        %1043 = vmatprep.subr.bf16.mxu0 0
        %1044 = vmatpush2.bf16.xpose.msra.mxu0 0
        %1045 = vmatprep.subr.bf16.mxu0 0
        %1046 = vmatpush2.bf16.xpose.msra.mxu0 0
        %1047 = vmatprep.subr.bf16.mxu0 0
        %1048 = vmatpush2.bf16.xpose.msra.mxu0 0
        %1049 = vmatprep.mubr.bf16.mxu0 0
        %1050 = vmatmul.mubr.bf16.gmra.mxu0 %v1012
        %v1051 = vpop.f32.mrf.mxu0
        %v1052 = vadd.f32 0.0, %v1051
        %v1053 = vpop.f32.mrf.mxu0
        %v1054 = vpop.f32.mrf.mxu0
        %v1055 = vpop.f32.mrf.mxu0
        %1056 = vdwg.mxu0
        %v1058 = vsel %vm964, %v662, 0
        %v1061 = vsel %vm964, %v812, 0
        %1063 = vmatprep.subr.bf16.mxu0 0
        %1064 = vmatpush1.bf16.xpose.msra.mxu0 0
        %1065 = vmatprep.subr.bf16.mxu0 0
        %1066 = vmatpush1.bf16.xpose.msra.mxu0 0
        %1067 = vmatprep.subr.bf16.mxu0 0
        %1068 = vmatpush1.bf16.xpose.msra.mxu0 0
        %1069 = vmatprep.subr.bf16.mxu0 0
        %1070 = vmatpush1.bf16.xpose.msra.mxu0 0
        %1071 = vmatprep.subr.bf16.mxu0 0
        %1072 = vmatpush1.bf16.xpose.msra.mxu0 0
        %1073 = vmatprep.subr.bf16.mxu0 0
        %1074 = vmatpush1.bf16.xpose.msra.mxu0 0
        %1075 = vmatprep.subr.bf16.mxu0 0
        %1076 = vmatpush1.bf16.xpose.msra.mxu0 0
        %1077 = vmatprep.subr.bf16.mxu0 0
        %1078 = vmatpush1.bf16.xpose.msra.mxu0 %v1061
        %1079 = vmatprep.subr.bf16.mxu0 0
        %1080 = vmatpush2.bf16.xpose.msra.mxu0 0
        %1081 = vmatprep.subr.bf16.mxu0 0
        %1082 = vmatpush2.bf16.xpose.msra.mxu0 0
        %1083 = vmatprep.subr.bf16.mxu0 0
        %1084 = vmatpush2.bf16.xpose.msra.mxu0 0
        %1085 = vmatprep.subr.bf16.mxu0 0
        %1086 = vmatpush2.bf16.xpose.msra.mxu0 0
        %1087 = vmatprep.subr.bf16.mxu0 0
        %1088 = vmatpush2.bf16.xpose.msra.mxu0 0
        %1089 = vmatprep.subr.bf16.mxu0 0
        %1090 = vmatpush2.bf16.xpose.msra.mxu0 0
        %1091 = vmatprep.subr.bf16.mxu0 0
        %1092 = vmatpush2.bf16.xpose.msra.mxu0 0
        %1093 = vmatprep.subr.bf16.mxu0 0
        %1094 = vmatpush2.bf16.xpose.msra.mxu0 0
        %1095 = vmatprep.mubr.bf16.mxu0 0
        %1096 = vmatmul.mubr.bf16.gmra.mxu0 %v1058
        %v1097 = vpop.f32.mrf.mxu0
        %v1098 = vadd.f32 0.0, %v1097
        %v1099 = vpop.f32.mrf.mxu0
        %v1100 = vpop.f32.mrf.mxu0
        %v1101 = vpop.f32.mrf.mxu0
        %1102 = vdwg.mxu0
        %v1104 = vsel %vm964, %v663, 0
        %v1107 = vsel %vm964, %v813, 0
        %1109 = vmatprep.subr.bf16.mxu0 0
        %1110 = vmatpush1.bf16.xpose.msra.mxu0 0
        %1111 = vmatprep.subr.bf16.mxu0 0
        %1112 = vmatpush1.bf16.xpose.msra.mxu0 0
        %1113 = vmatprep.subr.bf16.mxu0 0
        %1114 = vmatpush1.bf16.xpose.msra.mxu0 0
        %1115 = vmatprep.subr.bf16.mxu0 0
        %1116 = vmatpush1.bf16.xpose.msra.mxu0 0
        %1117 = vmatprep.subr.bf16.mxu0 0
        %1118 = vmatpush1.bf16.xpose.msra.mxu0 0
        %1119 = vmatprep.subr.bf16.mxu0 0
        %1120 = vmatpush1.bf16.xpose.msra.mxu0 0
        %1121 = vmatprep.subr.bf16.mxu0 0
        %1122 = vmatpush1.bf16.xpose.msra.mxu0 0
        %1123 = vmatprep.subr.bf16.mxu0 0
        %1124 = vmatpush1.bf16.xpose.msra.mxu0 %v1107
        %1125 = vmatprep.subr.bf16.mxu0 0
        %1126 = vmatpush2.bf16.xpose.msra.mxu0 0
        %1127 = vmatprep.subr.bf16.mxu0 0
        %1128 = vmatpush2.bf16.xpose.msra.mxu0 0
        %1129 = vmatprep.subr.bf16.mxu0 0
        %1130 = vmatpush2.bf16.xpose.msra.mxu0 0
        %1131 = vmatprep.subr.bf16.mxu0 0
        %1132 = vmatpush2.bf16.xpose.msra.mxu0 0
        %1133 = vmatprep.subr.bf16.mxu0 0
        %1134 = vmatpush2.bf16.xpose.msra.mxu0 0
        %1135 = vmatprep.subr.bf16.mxu0 0
        %1136 = vmatpush2.bf16.xpose.msra.mxu0 0
        %1137 = vmatprep.subr.bf16.mxu0 0
        %1138 = vmatpush2.bf16.xpose.msra.mxu0 0
        %1139 = vmatprep.subr.bf16.mxu0 0
        %1140 = vmatpush2.bf16.xpose.msra.mxu0 0
        %1141 = vmatprep.mubr.bf16.mxu0 0
        %1142 = vmatmul.mubr.bf16.gmra.mxu0 %v1104
        %v1143 = vpop.f32.mrf.mxu0
        %v1144 = vadd.f32 0.0, %v1143
        %v1145 = vpop.f32.mrf.mxu0
        %v1146 = vpop.f32.mrf.mxu0
        %v1147 = vpop.f32.mrf.mxu0
        %1148 = vdwg.mxu0
        %vm1149 = vcmask 64512
        %v1150 = vsel %vm1149, %v1006, -inf
        %1151 = vmax.xlane.f32.xlu0 %v1150
        %v1152 = vpop.xlane.xlu0 %1151
        %v1153 = vsel %vm1149, %v1052, -inf
        %1154 = vmax.xlane.f32.xlu0 %v1153
        %v1155 = vpop.xlane.xlu0 %1154
        %v1156 = vsel %vm1149, %v1098, -inf
        %1157 = vmax.xlane.f32.xlu0 %v1156
        %v1158 = vpop.xlane.xlu0 %1157
        %v1159 = vsel %vm1149, %v1144, -inf
        %1160 = vmax.xlane.f32.xlu0 %v1159
        %v1161 = vpop.xlane.xlu0 %1160
        %v1162 = vsub.f32 %v1006, %v1152
        %v1163 = vsub.f32 %v1052, %v1155
        %v1164 = vsub.f32 %v1098, %v1158
        %v1165 = vsub.f32 %v1144, %v1161
        %v1166 = vmul.f32 %v1162, 1.442695
        %v1167 = vpow.pop %v1166
        %v1168 = vmul.f32 %v1163, 1.442695
        %v1169 = vpow.pop %v1168
        %v1170 = vmul.f32 %v1164, 1.442695
        %v1171 = vpow.pop %v1170
        %v1172 = vmul.f32 %v1165, 1.442695
        %v1173 = vpow.pop %v1172
        %v1174 = vsel %vm1149, %v1167, 0.0
        %1175 = vadd.xlane.f32.xlu0 %v1174
        %v1176 = vpop.xlane.xlu0 %1175
        %v1177 = vsel %vm1149, %v1169, 0.0
        %1178 = vadd.xlane.f32.xlu0 %v1177
        %v1179 = vpop.xlane.xlu0 %1178
        %v1180 = vsel %vm1149, %v1171, 0.0
        %1181 = vadd.xlane.f32.xlu0 %v1180
        %v1182 = vpop.xlane.xlu0 %1181
        %v1183 = vsel %vm1149, %v1173, 0.0
        %1184 = vadd.xlane.f32.xlu0 %v1183
        %v1185 = vpop.xlane.xlu0 %1184
        %v1186 = vrcp.pop %v1176
        %v1187 = vrcp.pop %v1179
        %v1188 = vrcp.pop %v1182
        %v1189 = vrcp.pop %v1185
        %v1190 = vmul.f32 %v1167, %v1186
        %v1191 = vmul.f32 %v1169, %v1187
        %v1192 = vmul.f32 %v1171, %v1188
        %v1193 = vmul.f32 %v1173, %v1189
        %v1194 = vpack.c.bf16 %v1190, %v1190
        %v1195 = vpack.c.bf16 %v1191, %v1191
        %v1196 = vpack.c.bf16 %v1192, %v1192
        %v1197 = vpack.c.bf16 %v1193, %v1193
        %v1199 = vsel %vm1149, %v1194, 0
        %vm1201 = vcmask 1043456
        %v1203 = vsel %vm1201, %v960, 0
        %1205 = vmatprep.subr.bf16.mxu0 0
        %1206 = vmatpush1.bf16.msra.mxu0 0
        %1207 = vmatprep.subr.bf16.mxu0 0
        %1208 = vmatpush1.bf16.msra.mxu0 0
        %1209 = vmatprep.subr.bf16.mxu0 0
        %1210 = vmatpush1.bf16.msra.mxu0 0
        %1211 = vmatprep.subr.bf16.mxu0 0
        %1212 = vmatpush1.bf16.msra.mxu0 0
        %1213 = vmatprep.subr.bf16.mxu0 0
        %1214 = vmatpush1.bf16.msra.mxu0 0
        %1215 = vmatprep.subr.bf16.mxu0 0
        %1216 = vmatpush1.bf16.msra.mxu0 0
        %1217 = vmatprep.subr.bf16.mxu0 0
        %1218 = vmatpush1.bf16.msra.mxu0 0
        %1219 = vmatprep.subr.bf16.mxu0 0
        %1220 = vmatpush1.bf16.msra.mxu0 %v1203
        %1221 = vmatprep.subr.bf16.mxu0 0
        %1222 = vmatpush2.bf16.msra.mxu0 0
        %1223 = vmatprep.subr.bf16.mxu0 0
        %1224 = vmatpush2.bf16.msra.mxu0 0
        %1225 = vmatprep.subr.bf16.mxu0 0
        %1226 = vmatpush2.bf16.msra.mxu0 0
        %1227 = vmatprep.subr.bf16.mxu0 0
        %1228 = vmatpush2.bf16.msra.mxu0 0
        %1229 = vmatprep.subr.bf16.mxu0 0
        %1230 = vmatpush2.bf16.msra.mxu0 0
        %1231 = vmatprep.subr.bf16.mxu0 0
        %1232 = vmatpush2.bf16.msra.mxu0 0
        %1233 = vmatprep.subr.bf16.mxu0 0
        %1234 = vmatpush2.bf16.msra.mxu0 0
        %1235 = vmatprep.subr.bf16.mxu0 0
        %1236 = vmatpush2.bf16.msra.mxu0 0
        %1237 = vmatprep.mubr.bf16.mxu0 0
        %1238 = vmatmul.mubr.bf16.gmra.mxu0 %v1199
        %v1239 = vpop.f32.mrf.mxu0
        %v1240 = vadd.f32 0.0, %v1239
        %v1241 = vpop.f32.mrf.mxu0
        %v1242 = vpop.f32.mrf.mxu0
        %v1243 = vpop.f32.mrf.mxu0
        %1244 = vdwg.mxu0
        %v1246 = vsel %vm1149, %v1195, 0
        %v1249 = vsel %vm1201, %v961, 0
        %1251 = vmatprep.subr.bf16.mxu0 0
        %1252 = vmatpush1.bf16.msra.mxu0 0
        %1253 = vmatprep.subr.bf16.mxu0 0
        %1254 = vmatpush1.bf16.msra.mxu0 0
        %1255 = vmatprep.subr.bf16.mxu0 0
        %1256 = vmatpush1.bf16.msra.mxu0 0
        %1257 = vmatprep.subr.bf16.mxu0 0
        %1258 = vmatpush1.bf16.msra.mxu0 0
        %1259 = vmatprep.subr.bf16.mxu0 0
        %1260 = vmatpush1.bf16.msra.mxu0 0
        %1261 = vmatprep.subr.bf16.mxu0 0
        %1262 = vmatpush1.bf16.msra.mxu0 0
        %1263 = vmatprep.subr.bf16.mxu0 0
        %1264 = vmatpush1.bf16.msra.mxu0 0
        %1265 = vmatprep.subr.bf16.mxu0 0
        %1266 = vmatpush1.bf16.msra.mxu0 %v1249
        %1267 = vmatprep.subr.bf16.mxu0 0
        %1268 = vmatpush2.bf16.msra.mxu0 0
        %1269 = vmatprep.subr.bf16.mxu0 0
        %1270 = vmatpush2.bf16.msra.mxu0 0
        %1271 = vmatprep.subr.bf16.mxu0 0
        %1272 = vmatpush2.bf16.msra.mxu0 0
        %1273 = vmatprep.subr.bf16.mxu0 0
        %1274 = vmatpush2.bf16.msra.mxu0 0
        %1275 = vmatprep.subr.bf16.mxu0 0
        %1276 = vmatpush2.bf16.msra.mxu0 0
        %1277 = vmatprep.subr.bf16.mxu0 0
        %1278 = vmatpush2.bf16.msra.mxu0 0
        %1279 = vmatprep.subr.bf16.mxu0 0
        %1280 = vmatpush2.bf16.msra.mxu0 0
        %1281 = vmatprep.subr.bf16.mxu0 0
        %1282 = vmatpush2.bf16.msra.mxu0 0
        %1283 = vmatprep.mubr.bf16.mxu0 0
        %1284 = vmatmul.mubr.bf16.gmra.mxu0 %v1246
        %v1285 = vpop.f32.mrf.mxu0
        %v1286 = vadd.f32 0.0, %v1285
        %v1287 = vpop.f32.mrf.mxu0
        %v1288 = vpop.f32.mrf.mxu0
        %v1289 = vpop.f32.mrf.mxu0
        %1290 = vdwg.mxu0
        %v1292 = vsel %vm1149, %v1196, 0
        %v1295 = vsel %vm1201, %v962, 0
        %1297 = vmatprep.subr.bf16.mxu0 0
        %1298 = vmatpush1.bf16.msra.mxu0 0
        %1299 = vmatprep.subr.bf16.mxu0 0
        %1300 = vmatpush1.bf16.msra.mxu0 0
        %1301 = vmatprep.subr.bf16.mxu0 0
        %1302 = vmatpush1.bf16.msra.mxu0 0
        %1303 = vmatprep.subr.bf16.mxu0 0
        %1304 = vmatpush1.bf16.msra.mxu0 0
        %1305 = vmatprep.subr.bf16.mxu0 0
        %1306 = vmatpush1.bf16.msra.mxu0 0
        %1307 = vmatprep.subr.bf16.mxu0 0
        %1308 = vmatpush1.bf16.msra.mxu0 0
        %1309 = vmatprep.subr.bf16.mxu0 0
        %1310 = vmatpush1.bf16.msra.mxu0 0
        %1311 = vmatprep.subr.bf16.mxu0 0
        %1312 = vmatpush1.bf16.msra.mxu0 %v1295
        %1313 = vmatprep.subr.bf16.mxu0 0
        %1314 = vmatpush2.bf16.msra.mxu0 0
        %1315 = vmatprep.subr.bf16.mxu0 0
        %1316 = vmatpush2.bf16.msra.mxu0 0
        %1317 = vmatprep.subr.bf16.mxu0 0
        %1318 = vmatpush2.bf16.msra.mxu0 0
        %1319 = vmatprep.subr.bf16.mxu0 0
        %1320 = vmatpush2.bf16.msra.mxu0 0
        %1321 = vmatprep.subr.bf16.mxu0 0
        %1322 = vmatpush2.bf16.msra.mxu0 0
        %1323 = vmatprep.subr.bf16.mxu0 0
        %1324 = vmatpush2.bf16.msra.mxu0 0
        %1325 = vmatprep.subr.bf16.mxu0 0
        %1326 = vmatpush2.bf16.msra.mxu0 0
        %1327 = vmatprep.subr.bf16.mxu0 0
        %1328 = vmatpush2.bf16.msra.mxu0 0
        %1329 = vmatprep.mubr.bf16.mxu0 0
        %1330 = vmatmul.mubr.bf16.gmra.mxu0 %v1292
        %v1331 = vpop.f32.mrf.mxu0
        %v1332 = vadd.f32 0.0, %v1331
        %v1333 = vpop.f32.mrf.mxu0
        %v1334 = vpop.f32.mrf.mxu0
        %v1335 = vpop.f32.mrf.mxu0
        %1336 = vdwg.mxu0
        %v1338 = vsel %vm1149, %v1197, 0
        %v1341 = vsel %vm1201, %v963, 0
        %1343 = vmatprep.subr.bf16.mxu0 0
        %1344 = vmatpush1.bf16.msra.mxu0 0
        %1345 = vmatprep.subr.bf16.mxu0 0
        %1346 = vmatpush1.bf16.msra.mxu0 0
        %1347 = vmatprep.subr.bf16.mxu0 0
        %1348 = vmatpush1.bf16.msra.mxu0 0
        %1349 = vmatprep.subr.bf16.mxu0 0
        %1350 = vmatpush1.bf16.msra.mxu0 0
        %1351 = vmatprep.subr.bf16.mxu0 0
        %1352 = vmatpush1.bf16.msra.mxu0 0
        %1353 = vmatprep.subr.bf16.mxu0 0
        %1354 = vmatpush1.bf16.msra.mxu0 0
        %1355 = vmatprep.subr.bf16.mxu0 0
        %1356 = vmatpush1.bf16.msra.mxu0 0
        %1357 = vmatprep.subr.bf16.mxu0 0
        %1358 = vmatpush1.bf16.msra.mxu0 %v1341
        %1359 = vmatprep.subr.bf16.mxu0 0
        %1360 = vmatpush2.bf16.msra.mxu0 0
        %1361 = vmatprep.subr.bf16.mxu0 0
        %1362 = vmatpush2.bf16.msra.mxu0 0
        %1363 = vmatprep.subr.bf16.mxu0 0
        %1364 = vmatpush2.bf16.msra.mxu0 0
        %1365 = vmatprep.subr.bf16.mxu0 0
        %1366 = vmatpush2.bf16.msra.mxu0 0
        %1367 = vmatprep.subr.bf16.mxu0 0
        %1368 = vmatpush2.bf16.msra.mxu0 0
        %1369 = vmatprep.subr.bf16.mxu0 0
        %1370 = vmatpush2.bf16.msra.mxu0 0
        %1371 = vmatprep.subr.bf16.mxu0 0
        %1372 = vmatpush2.bf16.msra.mxu0 0
        %1373 = vmatprep.subr.bf16.mxu0 0
        %1374 = vmatpush2.bf16.msra.mxu0 0
        %1375 = vmatprep.mubr.bf16.mxu0 0
        %1376 = vmatmul.mubr.bf16.gmra.mxu0 %v1338
        %v1377 = vpop.f32.mrf.mxu0
        %v1378 = vadd.f32 0.0, %v1377
        %v1379 = vpop.f32.mrf.mxu0
        %v1380 = vpop.f32.mrf.mxu0
        %v1381 = vpop.f32.mrf.mxu0
        %1382 = vdwg.mxu0
        %v1383 = vcombine.low %v1240, %v1332
        %v1384 = vcombine.high %v1240, %v1332
        %v1386 = vunpack.c.l.s4 1983009808
        %v1387 = vunpack.c.0.s8 %v1386
        %v1388 = vlaneseq
        %v1389 = vshrl.u32 %v1388, 7
        %v1390 = vsub.s32 %v1387, %v1389
        %v1391 = vrot.slane %v1383, %v1390
        %v1393 = vunpack.c.l.s4 1983009808
        %v1394 = vunpack.c.0.s8 %v1393
        %v1395 = vlaneseq
        %v1396 = vshrl.u32 %v1395, 7
        %v1397 = vsub.s32 %v1394, %v1396
        %v1398 = vrot.slane %v1384, %v1397
        %v1399 = vcombine.low %v1286, %v1378
        %v1400 = vcombine.high %v1286, %v1378
        %v1402 = vunpack.c.l.s4 1983009808
        %v1403 = vunpack.c.0.s8 %v1402
        %v1404 = vlaneseq
        %v1405 = vshrl.u32 %v1404, 7
        %v1406 = vsub.s32 %v1403, %v1405
        %v1407 = vrot.slane %v1399, %v1406
        %v1409 = vunpack.c.l.s4 1983009808
        %v1410 = vunpack.c.0.s8 %v1409
        %v1411 = vlaneseq
        %v1412 = vshrl.u32 %v1411, 7
        %v1413 = vsub.s32 %v1410, %v1412
        %v1414 = vrot.slane %v1400, %v1413
        %v1415 = vcombine.low %v1391, %v1407
        %v1416 = vcombine.high %v1391, %v1407
        %v1418 = vunpack.c.l.s4 1934713408
        %v1419 = vunpack.c.0.s8 %v1418
        %v1420 = vlaneseq
        %v1421 = vshrl.u32 %v1420, 7
        %v1422 = vsub.s32 %v1419, %v1421
        %v1423 = vrot.slane %v1415, %v1422
        %v1425 = vunpack.c.l.s4 1934713408
        %v1426 = vunpack.c.0.s8 %v1425
        %v1427 = vlaneseq
        %v1428 = vshrl.u32 %v1427, 7
        %v1429 = vsub.s32 %v1426, %v1428
        %v1430 = vrot.slane %v1416, %v1429
        %v1431 = vcombine.low %v1398, %v1414
        %v1432 = vcombine.high %v1398, %v1414
        %v1434 = vunpack.c.l.s4 1934713408
        %v1435 = vunpack.c.0.s8 %v1434
        %v1436 = vlaneseq
        %v1437 = vshrl.u32 %v1436, 7
        %v1438 = vsub.s32 %v1435, %v1437
        %v1439 = vrot.slane %v1431, %v1438
        %v1441 = vunpack.c.l.s4 1934713408
        %v1442 = vunpack.c.0.s8 %v1441
        %v1443 = vlaneseq
        %v1444 = vshrl.u32 %v1443, 7
        %v1445 = vsub.s32 %v1442, %v1444
        %v1446 = vrot.slane %v1432, %v1445
        %v1447 = vcombine.high %v1423, 0.0
        %v1448 = vcombine.high %v1430, 0.0
        %v1449 = vcombine.high %v1439, 0.0
        %v1450 = vcombine.high %v1446, 0.0
        %v1451 = vcombine.low %v1423, %v1430
        %v1453 = vunpack.c.l.s4 1983009808
        %v1454 = vunpack.c.0.s8 %v1453
        %v1455 = vlaneseq
        %v1456 = vshrl.u32 %v1455, 7
        %v1457 = vsub.s32 %v1454, %v1456
        %v1458 = vrot.slane %v1451, %v1457
        %v1459 = vcombine.low %v1447, %v1448
        %v1461 = vunpack.c.l.s4 1983009808
        %v1462 = vunpack.c.0.s8 %v1461
        %v1463 = vlaneseq
        %v1464 = vshrl.u32 %v1463, 7
        %v1465 = vsub.s32 %v1462, %v1464
        %v1466 = vrot.slane %v1459, %v1465
        %v1467 = vcombine.low %v1439, %v1446
        %v1469 = vunpack.c.l.s4 1983009808
        %v1470 = vunpack.c.0.s8 %v1469
        %v1471 = vlaneseq
        %v1472 = vshrl.u32 %v1471, 7
        %v1473 = vsub.s32 %v1470, %v1472
        %v1474 = vrot.slane %v1467, %v1473
        %v1475 = vcombine.low %v1449, %v1450
        %v1477 = vunpack.c.l.s4 1983009808
        %v1478 = vunpack.c.0.s8 %v1477
        %v1479 = vlaneseq
        %v1480 = vshrl.u32 %v1479, 7
        %v1481 = vsub.s32 %v1478, %v1480
        %v1482 = vrot.slane %v1475, %v1481
        %v1483 = vcombine.low %v1458, %v1466
        %v1484 = vcombine.high %v1458, %v1466
        %v1486 = vunpack.c.l.s4 1934713408
        %v1487 = vunpack.c.0.s8 %v1486
        %v1488 = vlaneseq
        %v1489 = vshrl.u32 %v1488, 7
        %v1490 = vsub.s32 %v1487, %v1489
        %v1491 = vrot.slane %v1483, %v1490
        %v1493 = vunpack.c.l.s4 1934713408
        %v1494 = vunpack.c.0.s8 %v1493
        %v1495 = vlaneseq
        %v1496 = vshrl.u32 %v1495, 7
        %v1497 = vsub.s32 %v1494, %v1496
        %v1498 = vrot.slane %v1484, %v1497
        %v1499 = vcombine.low %v1474, %v1482
        %v1500 = vcombine.high %v1474, %v1482
        %v1502 = vunpack.c.l.s4 1934713408
        %v1503 = vunpack.c.0.s8 %v1502
        %v1504 = vlaneseq
        %v1505 = vshrl.u32 %v1504, 7
        %v1506 = vsub.s32 %v1503, %v1505
        %v1507 = vrot.slane %v1499, %v1506
        %v1509 = vunpack.c.l.s4 1934713408
        %v1510 = vunpack.c.0.s8 %v1509
        %v1511 = vlaneseq
        %v1512 = vshrl.u32 %v1511, 7
        %v1513 = vsub.s32 %v1510, %v1512
        %v1514 = vrot.slane %v1500, %v1513
        %v1515 = vcombine.low %v1491, %v1507
        %v1516 = vcombine.high %v1491, %v1507
        %v1517 = vcombine.low %v1498, %v1514
        %v1518 = vcombine.high %v1498, %v1514
        %1520 = vrot.lane.b32.xlu0 %v1516, 16
        %v1521 = vpop.permute.xlu0 %1520
        %1524 = vrot.lane.b32.xlu0 %v1517, 32
        %v1525 = vpop.permute.xlu0 %1524
        %1528 = vrot.lane.b32.xlu0 %v1518, 48
        %v1529 = vpop.permute.xlu0 %1528
        %v1531 = vsel %vm964, %v1515, %v1521
        %vm1532 = vcmask 261120
        %v1533 = vsel %vm1532, %v1531, %v1525
        %vm1534 = vcmask 392192
        %v1535 = vsel %vm1534, %v1533, %v1529
        %v1536 = vpack.c.bf16 %v1535, %v1535
        %v1537 = vld [vmem:[%s5] sm:$0xff]
        %v1538 = vld [vmem:[%s5 + $0x8] sm:$0xff]
        %v1539 = vld [vmem:[%s5 + $0x10] sm:$0xff]
        %v1540 = vld [vmem:[%s5 + $0x18] sm:$0xff]
        %v1541 = vld [vmem:[%s5 + $0x20] sm:$0xff]
        %v1542 = vld [vmem:[%s5 + $0x28] sm:$0xff]
        %v1543 = vld [vmem:[%s5 + $0x30] sm:$0xff]
        %v1544 = vld [vmem:[%s5 + $0x38] sm:$0xff]
        %v1545 = vpack.c.bf16 %v1538, %v1537
        %v1546 = vpack.c.bf16 %v1540, %v1539
        %v1547 = vpack.c.bf16 %v1542, %v1541
        %v1548 = vpack.c.bf16 %v1544, %v1543
        %v1549 = vld [vmem:[%s6] sm:$0x1]
        %v1551 = vlaneseq
        %v1552 = vshrl.u32 %v1551, 7
        %v1553 = vsub.s32 0, %v1552
        %v1554 = vrot.slane %v1549, %v1553
        %vm1556 = vcmask 523264
        %v1558 = vsel %vm1556, %v1536, 0
        %1560 = vmatprep.subr.bf16.mxu0 0
        %1561 = vmatpush1.bf16.msra.mxu0 0
        %1562 = vmatprep.subr.bf16.mxu0 0
        %1563 = vmatpush1.bf16.msra.mxu0 0
        %1564 = vmatprep.subr.bf16.mxu0 0
        %1565 = vmatpush1.bf16.msra.mxu0 0
        %1566 = vmatprep.subr.bf16.mxu0 0
        %1567 = vmatpush1.bf16.msra.mxu0 0
        %1568 = vmatprep.subr.bf16.mxu0 0
        %1569 = vmatpush1.bf16.msra.mxu0 %v1548
        %1570 = vmatprep.subr.bf16.mxu0 0
        %1571 = vmatpush1.bf16.msra.mxu0 %v1547
        %1572 = vmatprep.subr.bf16.mxu0 0
        %1573 = vmatpush1.bf16.msra.mxu0 %v1546
        %1574 = vmatprep.subr.bf16.mxu0 0
        %1575 = vmatpush1.bf16.msra.mxu0 %v1545
        %1576 = vmatprep.subr.bf16.mxu0 0
        %1577 = vmatpush2.bf16.msra.mxu0 0
        %1578 = vmatprep.subr.bf16.mxu0 0
        %1579 = vmatpush2.bf16.msra.mxu0 0
        %1580 = vmatprep.subr.bf16.mxu0 0
        %1581 = vmatpush2.bf16.msra.mxu0 0
        %1582 = vmatprep.subr.bf16.mxu0 0
        %1583 = vmatpush2.bf16.msra.mxu0 0
        %1584 = vmatprep.subr.bf16.mxu0 0
        %1585 = vmatpush2.bf16.msra.mxu0 0
        %1586 = vmatprep.subr.bf16.mxu0 0
        %1587 = vmatpush2.bf16.msra.mxu0 0
        %1588 = vmatprep.subr.bf16.mxu0 0
        %1589 = vmatpush2.bf16.msra.mxu0 0
        %1590 = vmatprep.subr.bf16.mxu0 0
        %1591 = vmatpush2.bf16.msra.mxu0 0
        %1592 = vmatprep.mubr.bf16.mxu0 0
        %1593 = vmatmul.mubr.bf16.gmra.mxu0 %v1558
        %v1594 = vpop.f32.mrf.mxu0
        %v1595 = vadd.f32 %v1554, %v1594
        %v1596 = vpop.f32.mrf.mxu0
        %v1597 = vpop.f32.mrf.mxu0
        %v1598 = vpop.f32.mrf.mxu0
        %1599 = vdwg.mxu0
        %1600 = vst [vmem:[%s304] sm:$0xff] %v1595
        %s1601 = sand.u32 %s202, 1
        %s1602 = scalar_lea.sflag [#allocation3], %s1601
        %s1603 = sand.u32 %s202, 1
        %s1604 = smul.addr %s1603, 8
        %s1605 = scalar_lea.vmem [#allocation2], %s1604
        // Predicated region
        $region49: #{tpu_custom_call.1} parent=47 // pred_check
          %p1606 = pneg %p212
        $region50: #{tpu_custom_call.1} parent=47 // pred_check_branch
          %1608 = sbr.rel (%p1606) target = $region52
        $region51: #{tpu_custom_call.1} parent=47 // pred_region
          %s1610 = ssub.s32 128, 128
          %1611 = vsyncadd %s1602, %s1610
          %s1612 = sadd.s32 %s26, %s25
          %s1613 = smul.addr %s1612, 128
          %s1614 = scalar_lea.hbm %s7, %s1613
          %s1616 = sshll.u32 %s1605, 4
          %s1617 = int_to_ptr.vmem [resolvable:$true] %s1616
          %1619 = dma.vmem_to_hbm [thread:$0]  %s1617, 128, %s1614, %s1602
        $region52: #{tpu_custom_call.1} parent=47 // pred_fallthru
          _
      $region48: #{tpu_custom_call.1} parent=5 // pred_fallthru
        _
      %p1620 = scmp.le.s32.totalorder 2, %s16
      // Predicated region
      $region53: #{tpu_custom_call.1} parent=5 // pred_check
        %p1621 = pneg %p1620
      $region54: #{tpu_custom_call.1} parent=5 // pred_check_branch
        %1623 = sbr.rel (%p1621) target = $region56
      $region55: #{tpu_custom_call.1} parent=5 // pred_region
        %s1624 = ssub.s32 %s16, 2
        // Predicated region
        $region57: #{tpu_custom_call.1} parent=55 // pred_check
          %p1625 = pneg %p218
        $region58: #{tpu_custom_call.1} parent=55 // pred_check_branch
          %1627 = sbr.rel (%p1625) target = $region60
        $region59: #{tpu_custom_call.1} parent=55 // pred_region
          %s1628 = sand.u32 %s203, 1
          %s1629 = scalar_lea.sflag [#allocation3], %s1628
          %s1630 = sand.u32 %s203, 1
          %s1631 = smul.addr %s1630, 8
          %s1632 = scalar_lea.vmem [#allocation2], %s1631
          %1633 = dma.done %s1629, 128
        $region60: #{tpu_custom_call.1} parent=55 // pred_fallthru
          _
      $region56: #{tpu_custom_call.1} parent=5 // pred_fallthru
        _
    $region6: #{tpu_custom_call.1} parent=1 // loop_footer
      %s20 = sadd.s32 1, %s16
    $region7: #{tpu_custom_call.1} parent=1 // loop_footer_branch
      %15 = sbr.rel target = $region3
    $region8: #{tpu_custom_call.1} parent=1 // loop_exit
      _
    %1634 = vsyncpa [#allocation3], 1
    %s1635 = scalar_lea.sflag [#allocation3], 1
    %1636 = vsyncpa %s1635, 1

</llo_original>
